<compile_context>
chip_gen: v6e
topology: v6e:2x2x1
jax: 0.10.0
libtpu: 0.0.40
codegen_flags: <defaults>
</compile_context>

<pallas_src>
import functools
import math

import jax
import jax.numpy as jnp
import numpy as np
from jax.experimental import pallas as pl
from jax.experimental.pallas import tpu as pltpu


# --------------------------- tile-size helpers -------------------------------
def _sublane_tile(dim, preferred=256):
    """Tile for a second-to-last (sublane) dim: multiple of 8, or the full dim."""
    for t in (preferred, 256, 128, 64, 32, 16, 8):
        if t <= dim and dim % t == 0:
            return t
    return dim


def _lane_tile(dim, preferred=512):
    """Tile for a last (lane) dim: multiple of 128, or the full dim."""
    for t in (preferred, 512, 256, 128):
        if t <= dim and dim % t == 0:
            return t
    return dim


# ------------------------- generic tiled linear kernel ------------------------
def _linear_kernel(x_ref, w_ref, b_ref, o_ref, acc_ref):
    kk = pl.program_id(2)

    @pl.when(kk == 0)
    def _():
        acc_ref[...] = jnp.zeros_like(acc_ref)

    acc_ref[...] += jnp.dot(x_ref[...], w_ref[...],
                            preferred_element_type=jnp.float32)

    @pl.when(kk == pl.num_programs(2) - 1)
    def _():
        o_ref[...] = (acc_ref[...] + b_ref[...].astype(jnp.float32)
                      ).astype(o_ref.dtype)


def linear(x2, w, b, out_dtype=None):
    """y = x2 @ w + b.  Tiled over (M, N, K); f32 accumulator; bias at finalize."""
    M, K = x2.shape
    N = w.shape[1]
    out_dtype = out_dtype or x2.dtype
    tm = _sublane_tile(M)
    tk = _lane_tile(K)
    tn = _lane_tile(N)
    in_sz = jnp.dtype(x2.dtype).itemsize
    out_sz = jnp.dtype(out_dtype).itemsize
    cost = pl.CostEstimate(
        flops=2 * M * K * N, transcendentals=0,
        bytes_accessed=in_sz * (M * K + K * N) + out_sz * M * N + 4 * N)
    return pl.pallas_call(
        _linear_kernel,
        out_shape=jax.ShapeDtypeStruct((M, N), out_dtype),
        grid=(M // tm, N // tn, K // tk),
        in_specs=[
            pl.BlockSpec((tm, tk), lambda i, j, kk: (i, kk)),
            pl.BlockSpec((tk, tn), lambda i, j, kk: (kk, j)),
            pl.BlockSpec((1, tn), lambda i, j, kk: (0, j)),
        ],
        out_specs=pl.BlockSpec((tm, tn), lambda i, j, kk: (i, j)),
        scratch_shapes=[pltpu.VMEM((tm, tn), jnp.float32)],
        compiler_params=pltpu.CompilerParams(
            dimension_semantics=("parallel", "parallel", "arbitrary"),
            vmem_limit_bytes=32 * 1024 * 1024),
        cost_estimate=cost,
    )(x2, w, b.reshape(1, N).astype(jnp.float32))


# -------------------------- flash GQA attention kernel ------------------------
def _flash_gqa_kernel(q_ref, k_ref, v_ref, o_ref, m_sc, l_sc, acc_sc, *,
                      heads_per_group, d_head):
    # q_ref: (tq, hpg*d_head)   k_ref/v_ref: (tk, d_head)   o_ref: (tq, hpg*d_head)
    ki = pl.program_id(3)

    @pl.when(ki == 0)
    def _():
        m_sc[...] = jnp.full_like(m_sc, -jnp.inf)
        l_sc[...] = jnp.zeros_like(l_sc)
        acc_sc[...] = jnp.zeros_like(acc_sc)

    q = q_ref[...]          # 1/sqrt(d_head) already folded into W_q / b_q
    k = k_ref[...]
    v = v_ref[...]

    for h in range(heads_per_group):        # small static loop (one group resident)
        lo = h * d_head
        hi = lo + d_head
        qh = q[:, lo:hi]                                           # (tq, d_head)
        # contract last dims directly (no in-kernel k.T transpose)
        s = jax.lax.dot_general(qh, k, (((1,), (1,)), ((), ())),
                                preferred_element_type=jnp.float32)  # (tq, tk)
        m_prev = m_sc[:, h:h + 1]
        l_prev = l_sc[:, h:h + 1]
        m_new = jnp.maximum(m_prev, jnp.max(s, axis=-1, keepdims=True))
        alpha = jnp.exp(m_prev - m_new)
        p = jnp.exp(s - m_new)
        l_sc[:, h:h + 1] = alpha * l_prev + jnp.sum(p, axis=-1, keepdims=True)
        acc_sc[:, lo:hi] = alpha * acc_sc[:, lo:hi] + jnp.dot(
            p.astype(v.dtype), v, preferred_element_type=jnp.float32)
        m_sc[:, h:h + 1] = m_new

    @pl.when(ki == pl.num_programs(3) - 1)
    def _():
        inv = pl.reciprocal(l_sc[...], approx=True)                # EUP slot
        for h in range(heads_per_group):
            lo = h * d_head
            hi = lo + d_head
            o_ref[:, lo:hi] = (acc_sc[:, lo:hi] * inv[:, h:h + 1]
                               ).astype(o_ref.dtype)


def gqa_attention(q4, k4, v4, *, heads_per_group, d_head):
    """q4: [b, G, n, hpg*d_head], k4/v4: [b, G, n, d_head] -> [b, G, n, hpg*d_head]."""
    b, G, n, wg = q4.shape
    tq = _sublane_tile(n, preferred=256)
    tk = _sublane_tile(n, preferred=256)
    H = G * heads_per_group
    isz = jnp.dtype(q4.dtype).itemsize
    cost = pl.CostEstimate(
        flops=4 * b * H * n * n * d_head,
        transcendentals=b * H * n * n,
        bytes_accessed=isz * (2 * b * G * n * wg + 2 * b * G * n * d_head))
    kern = functools.partial(_flash_gqa_kernel,
                             heads_per_group=heads_per_group, d_head=d_head)
    return pl.pallas_call(
        kern,
        out_shape=jax.ShapeDtypeStruct((b, G, n, wg), q4.dtype),
        grid=(b, G, n // tq, n // tk),
        in_specs=[
            pl.BlockSpec((None, None, tq, wg),
                         lambda bi, g, qi, ki: (bi, g, qi, 0)),
            pl.BlockSpec((None, None, tk, d_head),
                         lambda bi, g, qi, ki: (bi, g, ki, 0)),
            pl.BlockSpec((None, None, tk, d_head),
                         lambda bi, g, qi, ki: (bi, g, ki, 0)),
        ],
        out_specs=pl.BlockSpec((None, None, tq, wg),
                               lambda bi, g, qi, ki: (bi, g, qi, 0)),
        scratch_shapes=[
            pltpu.VMEM((tq, heads_per_group), jnp.float32),   # running max
            pltpu.VMEM((tq, heads_per_group), jnp.float32),   # running denom
            pltpu.VMEM((tq, wg), jnp.float32),                # running output
        ],
        compiler_params=pltpu.CompilerParams(
            dimension_semantics=("parallel", "parallel", "parallel", "arbitrary"),
            vmem_limit_bytes=32 * 1024 * 1024),
        cost_estimate=cost,
    )(q4, k4, v4)


# ------------------------------ parameter prep --------------------------------
def prepare_params(params, num_query_heads, compute_dtype=jnp.bfloat16):
    """One-time prep: fold 1/sqrt(d_head) into W_q/b_q, fuse W_q|W_k|W_v, cast."""
    d_model = params["wq"].shape[0]
    d_head = d_model // num_query_heads
    scale = 1.0 / math.sqrt(d_head)
    w_qkv = jnp.concatenate(
        [params["wq"] * scale, params["wk"], params["wv"]], axis=1)
    b_qkv = jnp.concatenate(
        [params["bq"] * scale, params["bk"], params["bv"]], axis=0)
    return {
        "w_qkv": w_qkv.astype(compute_dtype),
        "b_qkv": b_qkv.astype(jnp.float32),
        "wo": params["wo"].astype(compute_dtype),
        "bo": params["bo"].astype(jnp.float32),
    }


# -------------------------------- full forward --------------------------------
def gqa_forward(x, prep, num_query_heads, num_kv_groups):
    b, n, d_model = x.shape
    d_head = d_model // num_query_heads
    hpg = num_query_heads // num_kv_groups
    wg = hpg * d_head
    d_kv = num_kv_groups * d_head
    compute_dtype = prep["w_qkv"].dtype
    out_dtype = x.dtype

    # Fused Q/K/V projection: x streamed from HBM once, N-tiled output.
    x2 = x.reshape(b * n, d_model).astype(compute_dtype)
    qkv = linear(x2, prep["w_qkv"], prep["b_qkv"], out_dtype=compute_dtype)
    q2 = qkv[:, :d_model]
    k2 = qkv[:, d_model:d_model + d_kv]
    v2 = qkv[:, d_model + d_kv:]

    # Group-major layout (one cheap XLA relayout outside the kernels) so every
    # Pallas block is full-width on its last dim and lane-dense.
    q4 = q2.reshape(b, n, num_kv_groups, wg).transpose(0, 2, 1, 3)
    k4 = k2.reshape(b, n, num_kv_groups, d_head).transpose(0, 2, 1, 3)
    v4 = v2.reshape(b, n, num_kv_groups, d_head).transpose(0, 2, 1, 3)

    o4 = gqa_attention(q4, k4, v4, heads_per_group=hpg, d_head=d_head)
    o2 = o4.transpose(0, 2, 1, 3).reshape(b * n, d_model)

    out = linear(o2, prep["wo"], prep["bo"], out_dtype=out_dtype)
    return out.reshape(b, n, d_model)


# ------------------------- pure-JAX reference (check) --------------------------
def gqa_reference(x, params, num_query_heads, num_kv_groups):
    b, n, d_model = x.shape
    d_head = d_model // num_query_heads
    hpg = num_query_heads // num_kv_groups
    q = x @ params["wq"] + params["bq"]
    k = x @ params["wk"] + params["bk"]
    v = x @ params["wv"] + params["bv"]
    q = q.reshape(b, n, num_query_heads, d_head).transpose(0, 2, 1, 3)
    k = k.reshape(b, n, num_kv_groups, d_head).transpose(0, 2, 1, 3)
    v = v.reshape(b, n, num_kv_groups, d_head).transpose(0, 2, 1, 3)
    outs = []
    for g in range(num_kv_groups):
        qs = q[:, g * hpg:(g + 1) * hpg]
        kg = k[:, g:g + 1]
        vg = v[:, g:g + 1]
        s = jnp.einsum("bhqd,bgkd->bhqk", qs, kg) / (d_head ** 0.5)
        p = jax.nn.softmax(s, axis=-1)
        outs.append(jnp.einsum("bhqk,bgkd->bhqd", p, vg))
    o = jnp.concatenate(outs, axis=1).transpose(0, 2, 1, 3).reshape(b, n, d_model)
    return o @ params["wo"] + params["bo"]


# ------------------------------------ main ------------------------------------
if __name__ == "__main__":
    b, n, d_model = 2, 8, 32
    num_query_heads, num_kv_groups = 8, 2
    d_kv = d_model // num_query_heads * num_kv_groups   # = 8

    key = jax.random.PRNGKey(0)
    ks = jax.random.split(key, 9)
    sc = 0.1
    params = {
        "wq": sc * jax.random.normal(ks[0], (d_model, d_model), jnp.float32),
        "bq": sc * jax.random.normal(ks[1], (d_model,), jnp.float32),
        "wk": sc * jax.random.normal(ks[2], (d_model, d_kv), jnp.float32),
        "bk": sc * jax.random.normal(ks[3], (d_kv,), jnp.float32),
        "wv": sc * jax.random.normal(ks[4], (d_model, d_kv), jnp.float32),
        "bv": sc * jax.random.normal(ks[5], (d_kv,), jnp.float32),
        "wo": sc * jax.random.normal(ks[6], (d_model, d_model), jnp.float32),
        "bo": sc * jax.random.normal(ks[7], (d_model,), jnp.float32),
    }
    x = jax.random.normal(ks[8], (b, n, d_model), jnp.float32)

    ref = gqa_reference(x, params, num_query_heads, num_kv_groups)

    fwd = jax.jit(functools.partial(gqa_forward,
                                    num_query_heads=num_query_heads,
                                    num_kv_groups=num_kv_groups))

    # f32 MXU path — tight tolerance (approx reciprocal ~1e-4 rel error).
    prep_f32 = prepare_params(params, num_query_heads, compute_dtype=jnp.float32)
    out_f32 = jax.block_until_ready(fwd(x, prep_f32))
    np.testing.assert_allclose(np.asarray(out_f32), np.asarray(ref),
                               rtol=2e-3, atol=2e-3)

    # bf16 MXU path (production dtype) — loose tolerance for bf16 quantization.
    prep_bf16 = prepare_params(params, num_query_heads, compute_dtype=jnp.bfloat16)
    out_bf16 = jax.block_until_ready(fwd(x, prep_bf16))
    np.testing.assert_allclose(np.asarray(out_bf16), np.asarray(ref),
                               rtol=5e-2, atol=5e-2)

    print("KERNEL_OK")
</pallas_src>

<mosaic_0001>
module attributes {stable_mosaic.version = 11 : i64} {
  func.func @_linear_kernel(%arg0: i32, %arg1: i32, %arg2: i32, %arg3: memref<16x32xf32, #tpu.memory_space<vmem>>, %arg4: memref<32x48xf32, #tpu.memory_space<vmem>>, %arg5: memref<1x48xf32, #tpu.memory_space<vmem>>, %arg6: memref<16x48xf32, #tpu.memory_space<vmem>>, %arg7: memref<16x48xf32, #tpu.memory_space<vmem>>) attributes {dimension_semantics = [#tpu.dimension_semantics<parallel>, #tpu.dimension_semantics<parallel>, #tpu.dimension_semantics<arbitrary>], iteration_bounds = array<i64: 1, 1, 1>, scalar_prefetch = 0 : i64, scratch_operands = 1 : i64, tpu.core_type = #tpu.core_type<tc>, window_params = [{transform_indices = @transform_0, window_bounds = array<i64: 16, 32>}, {transform_indices = @transform_1, window_bounds = array<i64: 32, 48>}, {transform_indices = @transform_2, window_bounds = array<i64: 1, 48>}, {transform_indices = @transform_3, window_bounds = array<i64: 16, 48>}]} {
    %c0_i32 = arith.constant 0 : i32
    %0 = arith.cmpi eq, %arg2, %c0_i32 : i32
    %1 = arith.extui %0 : i1 to i32
    %c0_i32_0 = arith.constant 0 : i32
    %2 = arith.cmpi ne, %1, %c0_i32_0 : i32
    scf.if %2 {
      %cst_10 = arith.constant 0.000000e+00 : f32
      %12 = vector.broadcast %cst_10 : f32 to vector<16x48xf32>
      %c0_11 = arith.constant 0 : index
      %c0_12 = arith.constant 0 : index
      %13 = vector.load %arg7[%c0_11, %c0_12] : memref<16x48xf32, #tpu.memory_space<vmem>>, vector<16x48xf32>
      tpu.vector_store %arg7[%c0_11, %c0_12], %12 {strides = array<i32>} : memref<16x48xf32, #tpu.memory_space<vmem>>, vector<16x48xf32>,
    } else {
    }
    %c0 = arith.constant 0 : index
    %c0_1 = arith.constant 0 : index
    %3 = vector.load %arg7[%c0, %c0_1] : memref<16x48xf32, #tpu.memory_space<vmem>>, vector<16x48xf32>
    %c0_2 = arith.constant 0 : index
    %c0_3 = arith.constant 0 : index
    %4 = vector.load %arg3[%c0_2, %c0_3] : memref<16x32xf32, #tpu.memory_space<vmem>>, vector<16x32xf32>
    %c0_4 = arith.constant 0 : index
    %c0_5 = arith.constant 0 : index
    %5 = vector.load %arg4[%c0_4, %c0_5] : memref<32x48xf32, #tpu.memory_space<vmem>>, vector<32x48xf32>
    %cst = arith.constant dense<0.000000e+00> : vector<16x48xf32>
    %6 = tpu.matmul %4, %5, %cst {dimension_numbers = #tpu.dot_dimension_numbers<[1], [0], [0], [1], [0, 0, 1, 1], [], []>} : vector<16x32xf32>, vector<32x48xf32>, vector<16x48xf32> -> vector<16x48xf32>
    %7 = arith.addf %3, %6 : vector<16x48xf32>
    %c0_6 = arith.constant 0 : index
    %c0_7 = arith.constant 0 : index
    %8 = vector.load %arg7[%c0_6, %c0_7] : memref<16x48xf32, #tpu.memory_space<vmem>>, vector<16x48xf32>
    tpu.vector_store %arg7[%c0_6, %c0_7], %7 {strides = array<i32>} : memref<16x48xf32, #tpu.memory_space<vmem>>, vector<16x48xf32>,
    %c0_i32_8 = arith.constant 0 : i32
    %9 = arith.cmpi eq, %arg2, %c0_i32_8 : i32
    %10 = arith.extui %9 : i1 to i32
    %c0_i32_9 = arith.constant 0 : i32
    %11 = arith.cmpi ne, %10, %c0_i32_9 : i32
    scf.if %11 {
      %c0_10 = arith.constant 0 : index
      %c0_11 = arith.constant 0 : index
      %12 = vector.load %arg7[%c0_10, %c0_11] : memref<16x48xf32, #tpu.memory_space<vmem>>, vector<16x48xf32>
      %c0_12 = arith.constant 0 : index
      %c0_13 = arith.constant 0 : index
      %13 = vector.load %arg5[%c0_12, %c0_13] : memref<1x48xf32, #tpu.memory_space<vmem>>, vector<1x48xf32>
      %14 = vector.broadcast %13 : vector<1x48xf32> to vector<16x48xf32>
      %15 = arith.addf %12, %14 : vector<16x48xf32>
      %c0_14 = arith.constant 0 : index
      %c0_15 = arith.constant 0 : index
      %16 = vector.load %arg6[%c0_14, %c0_15] : memref<16x48xf32, #tpu.memory_space<vmem>>, vector<16x48xf32>
      tpu.vector_store %arg6[%c0_14, %c0_15], %15 {strides = array<i32>} : memref<16x48xf32, #tpu.memory_space<vmem>>, vector<16x48xf32>,
    } else {
    }
    return
  }
  func.func @transform_0(%arg0: i32, %arg1: i32, %arg2: i32) -> (i32, i32) {
    %c0_i32 = arith.constant 0 : i32
    return %arg0, %arg2 : i32, i32
  }
  func.func @transform_1(%arg0: i32, %arg1: i32, %arg2: i32) -> (i32, i32) {
    %c0_i32 = arith.constant 0 : i32
    return %arg2, %arg1 : i32, i32
  }
  func.func @transform_2(%arg0: i32, %arg1: i32, %arg2: i32) -> (i32, i32) {
    %c0_i32 = arith.constant 0 : i32
    %c0_i32_0 = arith.constant 0 : i32
    return %c0_i32, %arg1 : i32, i32
  }
  func.func @transform_3(%arg0: i32, %arg1: i32, %arg2: i32) -> (i32, i32) {
    %c0_i32 = arith.constant 0 : i32
    return %arg0, %arg1 : i32, i32
  }
}

module attributes {stable_mosaic.version = 11 : i64} {
  func.func @_flash_gqa_kernel(%arg0: i32, %arg1: i32, %arg2: i32, %arg3: i32, %arg4: memref<1x1x8x16xf32, #tpu.memory_space<vmem>>, %arg5: memref<1x1x8x4xf32, #tpu.memory_space<vmem>>, %arg6: memref<1x1x8x4xf32, #tpu.memory_space<vmem>>, %arg7: memref<1x1x8x16xf32, #tpu.memory_space<vmem>>, %arg8: memref<8x4xf32, #tpu.memory_space<vmem>>, %arg9: memref<8x4xf32, #tpu.memory_space<vmem>>, %arg10: memref<8x16xf32, #tpu.memory_space<vmem>>) attributes {dimension_semantics = [#tpu.dimension_semantics<parallel>, #tpu.dimension_semantics<parallel>, #tpu.dimension_semantics<parallel>, #tpu.dimension_semantics<arbitrary>], iteration_bounds = array<i64: 2, 2, 1, 1>, scalar_prefetch = 0 : i64, scratch_operands = 3 : i64, tpu.core_type = #tpu.core_type<tc>, window_params = [{transform_indices = @transform_0, window_bounds = array<i64: 1, 1, 8, 16>}, {transform_indices = @transform_1, window_bounds = array<i64: 1, 1, 8, 4>}, {transform_indices = @transform_2, window_bounds = array<i64: 1, 1, 8, 4>}, {transform_indices = @transform_3, window_bounds = array<i64: 1, 1, 8, 16>}]} {
    %c0_i32 = arith.constant 0 : i32
    %0 = arith.cmpi eq, %arg3, %c0_i32 : i32
    %1 = arith.extui %0 : i1 to i32
    %c0_i32_0 = arith.constant 0 : i32
    %2 = arith.cmpi ne, %1, %c0_i32_0 : i32
    scf.if %2 {
      %cst_71 = arith.constant 0xFF800000 : f32
      %108 = vector.broadcast %cst_71 : f32 to vector<8x4xf32>
      %c0_72 = arith.constant 0 : index
      %c0_73 = arith.constant 0 : index
      %109 = vector.load %arg8[%c0_72, %c0_73] : memref<8x4xf32, #tpu.memory_space<vmem>>, vector<8x4xf32>
      tpu.vector_store %arg8[%c0_72, %c0_73], %108 {strides = array<i32>} : memref<8x4xf32, #tpu.memory_space<vmem>>, vector<8x4xf32>,
      %cst_74 = arith.constant 0.000000e+00 : f32
      %110 = vector.broadcast %cst_74 : f32 to vector<8x4xf32>
      %c0_75 = arith.constant 0 : index
      %c0_76 = arith.constant 0 : index
      %111 = vector.load %arg9[%c0_75, %c0_76] : memref<8x4xf32, #tpu.memory_space<vmem>>, vector<8x4xf32>
      tpu.vector_store %arg9[%c0_75, %c0_76], %110 {strides = array<i32>} : memref<8x4xf32, #tpu.memory_space<vmem>>, vector<8x4xf32>,
      %cst_77 = arith.constant 0.000000e+00 : f32
      %112 = vector.broadcast %cst_77 : f32 to vector<8x16xf32>
      %c0_78 = arith.constant 0 : index
      %c0_79 = arith.constant 0 : index
      %113 = vector.load %arg10[%c0_78, %c0_79] : memref<8x16xf32, #tpu.memory_space<vmem>>, vector<8x16xf32>
      tpu.vector_store %arg10[%c0_78, %c0_79], %112 {strides = array<i32>} : memref<8x16xf32, #tpu.memory_space<vmem>>, vector<8x16xf32>,
    } else {
    }
    %c0 = arith.constant 0 : index
    %c0_1 = arith.constant 0 : index
    %c0_2 = arith.constant 0 : index
    %c0_3 = arith.constant 0 : index
    %3 = vector.load %arg4[%c0, %c0_1, %c0_2, %c0_3] : memref<1x1x8x16xf32, #tpu.memory_space<vmem>>, vector<1x1x8x16xf32>
    %4 = vector.shape_cast %3 : vector<1x1x8x16xf32> to vector<8x16xf32>
    %c0_4 = arith.constant 0 : index
    %c0_5 = arith.constant 0 : index
    %c0_6 = arith.constant 0 : index
    %c0_7 = arith.constant 0 : index
    %5 = vector.load %arg5[%c0_4, %c0_5, %c0_6, %c0_7] : memref<1x1x8x4xf32, #tpu.memory_space<vmem>>, vector<1x1x8x4xf32>
    %6 = vector.shape_cast %5 : vector<1x1x8x4xf32> to vector<8x4xf32>
    %c0_8 = arith.constant 0 : index
    %c0_9 = arith.constant 0 : index
    %c0_10 = arith.constant 0 : index
    %c0_11 = arith.constant 0 : index
    %7 = vector.load %arg6[%c0_8, %c0_9, %c0_10, %c0_11] : memref<1x1x8x4xf32, #tpu.memory_space<vmem>>, vector<1x1x8x4xf32>
    %8 = vector.shape_cast %7 : vector<1x1x8x4xf32> to vector<8x4xf32>
    %9 = vector.extract_strided_slice %4 {offsets = [0, 0], sizes = [8, 4], strides = [1, 1]} : vector<8x16xf32> to vector<8x4xf32>
    %cst = arith.constant dense<0.000000e+00> : vector<8x8xf32>
    %10 = tpu.matmul %9, %6, %cst {dimension_numbers = #tpu.dot_dimension_numbers<[1], [1], [0], [0], [0, 0, 1, 0], [], []>} : vector<8x4xf32>, vector<8x4xf32>, vector<8x8xf32> -> vector<8x8xf32>
    %c0_12 = arith.constant 0 : index
    %c0_13 = arith.constant 0 : index
    %11 = vector.load %arg8[%c0_12, %c0_13] : memref<8x4xf32, #tpu.memory_space<vmem>>, vector<8x1xf32>
    %c0_14 = arith.constant 0 : index
    %c0_15 = arith.constant 0 : index
    %12 = vector.load %arg9[%c0_14, %c0_15] : memref<8x4xf32, #tpu.memory_space<vmem>>, vector<8x1xf32>
    %cst_16 = arith.constant dense<0xFF800000> : vector<8xf32>
    %13 = vector.multi_reduction <maximumf>, %10, %cst_16 [1] : vector<8x8xf32> to vector<8xf32>
    %14 = vector.shape_cast %13 : vector<8xf32> to vector<8x1xf32>
    %15 = arith.maximumf %11, %14 : vector<8x1xf32>
    %16 = arith.subf %11, %15 : vector<8x1xf32>
    %17 = math.exp %16 : vector<8x1xf32>
    %18 = vector.broadcast %15 : vector<8x1xf32> to vector<8x8xf32>
    %19 = arith.subf %10, %18 : vector<8x8xf32>
    %20 = math.exp %19 : vector<8x8xf32>
    %21 = arith.mulf %17, %12 : vector<8x1xf32>
    %cst_17 = arith.constant dense<0.000000e+00> : vector<8xf32>
    %22 = vector.multi_reduction <add>, %20, %cst_17 [1] : vector<8x8xf32> to vector<8xf32>
    %23 = vector.shape_cast %22 : vector<8xf32> to vector<8x1xf32>
    %24 = arith.addf %21, %23 : vector<8x1xf32>
    %c0_18 = arith.constant 0 : index
    %c0_19 = arith.constant 0 : index
    %25 = vector.load %arg9[%c0_18, %c0_19] : memref<8x4xf32, #tpu.memory_space<vmem>>, vector<8x1xf32>
    tpu.vector_store %arg9[%c0_18, %c0_19], %24 {strides = array<i32>} : memref<8x4xf32, #tpu.memory_space<vmem>>, vector<8x1xf32>,
    %c0_20 = arith.constant 0 : index
    %c0_21 = arith.constant 0 : index
    %26 = vector.load %arg10[%c0_20, %c0_21] : memref<8x16xf32, #tpu.memory_space<vmem>>, vector<8x4xf32>
    %27 = vector.broadcast %17 : vector<8x1xf32> to vector<8x4xf32>
    %28 = arith.mulf %27, %26 : vector<8x4xf32>
    %cst_22 = arith.constant dense<0.000000e+00> : vector<8x4xf32>
    %29 = tpu.matmul %20, %8, %cst_22 {dimension_numbers = #tpu.dot_dimension_numbers<[1], [0], [0], [1], [0, 0, 1, 1], [], []>} : vector<8x8xf32>, vector<8x4xf32>, vector<8x4xf32> -> vector<8x4xf32>
    %30 = arith.addf %28, %29 : vector<8x4xf32>
    %c0_23 = arith.constant 0 : index
    %c0_24 = arith.constant 0 : index
    %31 = vector.load %arg10[%c0_23, %c0_24] : memref<8x16xf32, #tpu.memory_space<vmem>>, vector<8x4xf32>
    tpu.vector_store %arg10[%c0_23, %c0_24], %30 {strides = array<i32>} : memref<8x16xf32, #tpu.memory_space<vmem>>, vector<8x4xf32>,
    %c0_25 = arith.constant 0 : index
    %c0_26 = arith.constant 0 : index
    %32 = vector.load %arg8[%c0_25, %c0_26] : memref<8x4xf32, #tpu.memory_space<vmem>>, vector<8x1xf32>
    tpu.vector_store %arg8[%c0_25, %c0_26], %15 {strides = array<i32>} : memref<8x4xf32, #tpu.memory_space<vmem>>, vector<8x1xf32>,
    %33 = vector.extract_strided_slice %4 {offsets = [0, 4], sizes = [8, 4], strides = [1, 1]} : vector<8x16xf32> to vector<8x4xf32>
    %cst_27 = arith.constant dense<0.000000e+00> : vector<8x8xf32>
    %34 = tpu.matmul %33, %6, %cst_27 {dimension_numbers = #tpu.dot_dimension_numbers<[1], [1], [0], [0], [0, 0, 1, 0], [], []>} : vector<8x4xf32>, vector<8x4xf32>, vector<8x8xf32> -> vector<8x8xf32>
    %c0_28 = arith.constant 0 : index
    %c1 = arith.constant 1 : index
    %35 = vector.load %arg8[%c0_28, %c1] : memref<8x4xf32, #tpu.memory_space<vmem>>, vector<8x1xf32>
    %c0_29 = arith.constant 0 : index
    %c1_30 = arith.constant 1 : index
    %36 = vector.load %arg9[%c0_29, %c1_30] : memref<8x4xf32, #tpu.memory_space<vmem>>, vector<8x1xf32>
    %cst_31 = arith.constant dense<0xFF800000> : vector<8xf32>
    %37 = vector.multi_reduction <maximumf>, %34, %cst_31 [1] : vector<8x8xf32> to vector<8xf32>
    %38 = vector.shape_cast %37 : vector<8xf32> to vector<8x1xf32>
    %39 = arith.maximumf %35, %38 : vector<8x1xf32>
    %40 = arith.subf %35, %39 : vector<8x1xf32>
    %41 = math.exp %40 : vector<8x1xf32>
    %42 = vector.broadcast %39 : vector<8x1xf32> to vector<8x8xf32>
    %43 = arith.subf %34, %42 : vector<8x8xf32>
    %44 = math.exp %43 : vector<8x8xf32>
    %45 = arith.mulf %41, %36 : vector<8x1xf32>
    %cst_32 = arith.constant dense<0.000000e+00> : vector<8xf32>
    %46 = vector.multi_reduction <add>, %44, %cst_32 [1] : vector<8x8xf32> to vector<8xf32>
    %47 = vector.shape_cast %46 : vector<8xf32> to vector<8x1xf32>
    %48 = arith.addf %45, %47 : vector<8x1xf32>
    %c0_33 = arith.constant 0 : index
    %c1_34 = arith.constant 1 : index
    %49 = vector.load %arg9[%c0_33, %c1_34] : memref<8x4xf32, #tpu.memory_space<vmem>>, vector<8x1xf32>
    tpu.vector_store %arg9[%c0_33, %c1_34], %48 {strides = array<i32>} : memref<8x4xf32, #tpu.memory_space<vmem>>, vector<8x1xf32>,
    %c0_35 = arith.constant 0 : index
    %c4 = arith.constant 4 : index
    %50 = vector.load %arg10[%c0_35, %c4] : memref<8x16xf32, #tpu.memory_space<vmem>>, vector<8x4xf32>
    %51 = vector.broadcast %41 : vector<8x1xf32> to vector<8x4xf32>
    %52 = arith.mulf %51, %50 : vector<8x4xf32>
    %cst_36 = arith.constant dense<0.000000e+00> : vector<8x4xf32>
    %53 = tpu.matmul %44, %8, %cst_36 {dimension_numbers = #tpu.dot_dimension_numbers<[1], [0], [0], [1], [0, 0, 1, 1], [], []>} : vector<8x8xf32>, vector<8x4xf32>, vector<8x4xf32> -> vector<8x4xf32>
    %54 = arith.addf %52, %53 : vector<8x4xf32>
    %c0_37 = arith.constant 0 : index
    %c4_38 = arith.constant 4 : index
    %55 = vector.load %arg10[%c0_37, %c4_38] : memref<8x16xf32, #tpu.memory_space<vmem>>, vector<8x4xf32>
    tpu.vector_store %arg10[%c0_37, %c4_38], %54 {strides = array<i32>} : memref<8x16xf32, #tpu.memory_space<vmem>>, vector<8x4xf32>,
    %c0_39 = arith.constant 0 : index
    %c1_40 = arith.constant 1 : index
    %56 = vector.load %arg8[%c0_39, %c1_40] : memref<8x4xf32, #tpu.memory_space<vmem>>, vector<8x1xf32>
    tpu.vector_store %arg8[%c0_39, %c1_40], %39 {strides = array<i32>} : memref<8x4xf32, #tpu.memory_space<vmem>>, vector<8x1xf32>,
    %57 = vector.extract_strided_slice %4 {offsets = [0, 8], sizes = [8, 4], strides = [1, 1]} : vector<8x16xf32> to vector<8x4xf32>
    %cst_41 = arith.constant dense<0.000000e+00> : vector<8x8xf32>
    %58 = tpu.matmul %57, %6, %cst_41 {dimension_numbers = #tpu.dot_dimension_numbers<[1], [1], [0], [0], [0, 0, 1, 0], [], []>} : vector<8x4xf32>, vector<8x4xf32>, vector<8x8xf32> -> vector<8x8xf32>
    %c0_42 = arith.constant 0 : index
    %c2 = arith.constant 2 : index
    %59 = vector.load %arg8[%c0_42, %c2] : memref<8x4xf32, #tpu.memory_space<vmem>>, vector<8x1xf32>
    %c0_43 = arith.constant 0 : index
    %c2_44 = arith.constant 2 : index
    %60 = vector.load %arg9[%c0_43, %c2_44] : memref<8x4xf32, #tpu.memory_space<vmem>>, vector<8x1xf32>
    %cst_45 = arith.constant dense<0xFF800000> : vector<8xf32>
    %61 = vector.multi_reduction <maximumf>, %58, %cst_45 [1] : vector<8x8xf32> to vector<8xf32>
    %62 = vector.shape_cast %61 : vector<8xf32> to vector<8x1xf32>
    %63 = arith.maximumf %59, %62 : vector<8x1xf32>
    %64 = arith.subf %59, %63 : vector<8x1xf32>
    %65 = math.exp %64 : vector<8x1xf32>
    %66 = vector.broadcast %63 : vector<8x1xf32> to vector<8x8xf32>
    %67 = arith.subf %58, %66 : vector<8x8xf32>
    %68 = math.exp %67 : vector<8x8xf32>
    %69 = arith.mulf %65, %60 : vector<8x1xf32>
    %cst_46 = arith.constant dense<0.000000e+00> : vector<8xf32>
    %70 = vector.multi_reduction <add>, %68, %cst_46 [1] : vector<8x8xf32> to vector<8xf32>
    %71 = vector.shape_cast %70 : vector<8xf32> to vector<8x1xf32>
    %72 = arith.addf %69, %71 : vector<8x1xf32>
    %c0_47 = arith.constant 0 : index
    %c2_48 = arith.constant 2 : index
    %73 = vector.load %arg9[%c0_47, %c2_48] : memref<8x4xf32, #tpu.memory_space<vmem>>, vector<8x1xf32>
    tpu.vector_store %arg9[%c0_47, %c2_48], %72 {strides = array<i32>} : memref<8x4xf32, #tpu.memory_space<vmem>>, vector<8x1xf32>,
    %c0_49 = arith.constant 0 : index
    %c8 = arith.constant 8 : index
    %74 = vector.load %arg10[%c0_49, %c8] : memref<8x16xf32, #tpu.memory_space<vmem>>, vector<8x4xf32>
    %75 = vector.broadcast %65 : vector<8x1xf32> to vector<8x4xf32>
    %76 = arith.mulf %75, %74 : vector<8x4xf32>
    %cst_50 = arith.constant dense<0.000000e+00> : vector<8x4xf32>
    %77 = tpu.matmul %68, %8, %cst_50 {dimension_numbers = #tpu.dot_dimension_numbers<[1], [0], [0], [1], [0, 0, 1, 1], [], []>} : vector<8x8xf32>, vector<8x4xf32>, vector<8x4xf32> -> vector<8x4xf32>
    %78 = arith.addf %76, %77 : vector<8x4xf32>
    %c0_51 = arith.constant 0 : index
    %c8_52 = arith.constant 8 : index
    %79 = vector.load %arg10[%c0_51, %c8_52] : memref<8x16xf32, #tpu.memory_space<vmem>>, vector<8x4xf32>
    tpu.vector_store %arg10[%c0_51, %c8_52], %78 {strides = array<i32>} : memref<8x16xf32, #tpu.memory_space<vmem>>, vector<8x4xf32>,
    %c0_53 = arith.constant 0 : index
    %c2_54 = arith.constant 2 : index
    %80 = vector.load %arg8[%c0_53, %c2_54] : memref<8x4xf32, #tpu.memory_space<vmem>>, vector<8x1xf32>
    tpu.vector_store %arg8[%c0_53, %c2_54], %63 {strides = array<i32>} : memref<8x4xf32, #tpu.memory_space<vmem>>, vector<8x1xf32>,
    %81 = vector.extract_strided_slice %4 {offsets = [0, 12], sizes = [8, 4], strides = [1, 1]} : vector<8x16xf32> to vector<8x4xf32>
    %cst_55 = arith.constant dense<0.000000e+00> : vector<8x8xf32>
    %82 = tpu.matmul %81, %6, %cst_55 {dimension_numbers = #tpu.dot_dimension_numbers<[1], [1], [0], [0], [0, 0, 1, 0], [], []>} : vector<8x4xf32>, vector<8x4xf32>, vector<8x8xf32> -> vector<8x8xf32>
    %c0_56 = arith.constant 0 : index
    %c3 = arith.constant 3 : index
    %83 = vector.load %arg8[%c0_56, %c3] : memref<8x4xf32, #tpu.memory_space<vmem>>, vector<8x1xf32>
    %c0_57 = arith.constant 0 : index
    %c3_58 = arith.constant 3 : index
    %84 = vector.load %arg9[%c0_57, %c3_58] : memref<8x4xf32, #tpu.memory_space<vmem>>, vector<8x1xf32>
    %cst_59 = arith.constant dense<0xFF800000> : vector<8xf32>
    %85 = vector.multi_reduction <maximumf>, %82, %cst_59 [1] : vector<8x8xf32> to vector<8xf32>
    %86 = vector.shape_cast %85 : vector<8xf32> to vector<8x1xf32>
    %87 = arith.maximumf %83, %86 : vector<8x1xf32>
    %88 = arith.subf %83, %87 : vector<8x1xf32>
    %89 = math.exp %88 : vector<8x1xf32>
    %90 = vector.broadcast %87 : vector<8x1xf32> to vector<8x8xf32>
    %91 = arith.subf %82, %90 : vector<8x8xf32>
    %92 = math.exp %91 : vector<8x8xf32>
    %93 = arith.mulf %89, %84 : vector<8x1xf32>
    %cst_60 = arith.constant dense<0.000000e+00> : vector<8xf32>
    %94 = vector.multi_reduction <add>, %92, %cst_60 [1] : vector<8x8xf32> to vector<8xf32>
    %95 = vector.shape_cast %94 : vector<8xf32> to vector<8x1xf32>
    %96 = arith.addf %93, %95 : vector<8x1xf32>
    %c0_61 = arith.constant 0 : index
    %c3_62 = arith.constant 3 : index
    %97 = vector.load %arg9[%c0_61, %c3_62] : memref<8x4xf32, #tpu.memory_space<vmem>>, vector<8x1xf32>
    tpu.vector_store %arg9[%c0_61, %c3_62], %96 {strides = array<i32>} : memref<8x4xf32, #tpu.memory_space<vmem>>, vector<8x1xf32>,
    %c0_63 = arith.constant 0 : index
    %c12 = arith.constant 12 : index
    %98 = vector.load %arg10[%c0_63, %c12] : memref<8x16xf32, #tpu.memory_space<vmem>>, vector<8x4xf32>
    %99 = vector.broadcast %89 : vector<8x1xf32> to vector<8x4xf32>
    %100 = arith.mulf %99, %98 : vector<8x4xf32>
    %cst_64 = arith.constant dense<0.000000e+00> : vector<8x4xf32>
    %101 = tpu.matmul %92, %8, %cst_64 {dimension_numbers = #tpu.dot_dimension_numbers<[1], [0], [0], [1], [0, 0, 1, 1], [], []>} : vector<8x8xf32>, vector<8x4xf32>, vector<8x4xf32> -> vector<8x4xf32>
    %102 = arith.addf %100, %101 : vector<8x4xf32>
    %c0_65 = arith.constant 0 : index
    %c12_66 = arith.constant 12 : index
    %103 = vector.load %arg10[%c0_65, %c12_66] : memref<8x16xf32, #tpu.memory_space<vmem>>, vector<8x4xf32>
    tpu.vector_store %arg10[%c0_65, %c12_66], %102 {strides = array<i32>} : memref<8x16xf32, #tpu.memory_space<vmem>>, vector<8x4xf32>,
    %c0_67 = arith.constant 0 : index
    %c3_68 = arith.constant 3 : index
    %104 = vector.load %arg8[%c0_67, %c3_68] : memref<8x4xf32, #tpu.memory_space<vmem>>, vector<8x1xf32>
    tpu.vector_store %arg8[%c0_67, %c3_68], %87 {strides = array<i32>} : memref<8x4xf32, #tpu.memory_space<vmem>>, vector<8x1xf32>,
    %c0_i32_69 = arith.constant 0 : i32
    %105 = arith.cmpi eq, %arg3, %c0_i32_69 : i32
    %106 = arith.extui %105 : i1 to i32
    %c0_i32_70 = arith.constant 0 : i32
    %107 = arith.cmpi ne, %106, %c0_i32_70 : i32
    scf.if %107 {
      %c0_71 = arith.constant 0 : index
      %c0_72 = arith.constant 0 : index
      %108 = vector.load %arg9[%c0_71, %c0_72] : memref<8x4xf32, #tpu.memory_space<vmem>>, vector<8x4xf32>
      %109 = tpu.reciprocal %108 {approx = true} : vector<8x4xf32> -> vector<8x4xf32>
      %c0_73 = arith.constant 0 : index
      %c0_74 = arith.constant 0 : index
      %110 = vector.load %arg10[%c0_73, %c0_74] : memref<8x16xf32, #tpu.memory_space<vmem>>, vector<8x4xf32>
      %111 = vector.extract_strided_slice %109 {offsets = [0, 0], sizes = [8, 1], strides = [1, 1]} : vector<8x4xf32> to vector<8x1xf32>
      %112 = vector.broadcast %111 : vector<8x1xf32> to vector<8x4xf32>
      %113 = arith.mulf %110, %112 : vector<8x4xf32>
      %c0_75 = arith.constant 0 : index
      %c0_76 = arith.constant 0 : index
      %c0_77 = arith.constant 0 : index
      %c0_78 = arith.constant 0 : index
      %114 = vector.load %arg7[%c0_75, %c0_76, %c0_77, %c0_78] : memref<1x1x8x16xf32, #tpu.memory_space<vmem>>, vector<1x1x8x4xf32>
      %115 = vector.shape_cast %114 : vector<1x1x8x4xf32> to vector<8x4xf32>
      %116 = vector.shape_cast %113 : vector<8x4xf32> to vector<1x1x8x4xf32>
      tpu.vector_store %arg7[%c0_75, %c0_76, %c0_77, %c0_78], %116 {strides = array<i32>} : memref<1x1x8x16xf32, #tpu.memory_space<vmem>>, vector<1x1x8x4xf32>,
      %c0_79 = arith.constant 0 : index
      %c4_80 = arith.constant 4 : index
      %117 = vector.load %arg10[%c0_79, %c4_80] : memref<8x16xf32, #tpu.memory_space<vmem>>, vector<8x4xf32>
      %118 = vector.extract_strided_slice %109 {offsets = [0, 1], sizes = [8, 1], strides = [1, 1]} : vector<8x4xf32> to vector<8x1xf32>
      %119 = vector.broadcast %118 : vector<8x1xf32> to vector<8x4xf32>
      %120 = arith.mulf %117, %119 : vector<8x4xf32>
      %c0_81 = arith.constant 0 : index
      %c0_82 = arith.constant 0 : index
      %c0_83 = arith.constant 0 : index
      %c4_84 = arith.constant 4 : index
      %121 = vector.load %arg7[%c0_81, %c0_82, %c0_83, %c4_84] : memref<1x1x8x16xf32, #tpu.memory_space<vmem>>, vector<1x1x8x4xf32>
      %122 = vector.shape_cast %121 : vector<1x1x8x4xf32> to vector<8x4xf32>
      %123 = vector.shape_cast %120 : vector<8x4xf32> to vector<1x1x8x4xf32>
      tpu.vector_store %arg7[%c0_81, %c0_82, %c0_83, %c4_84], %123 {strides = array<i32>} : memref<1x1x8x16xf32, #tpu.memory_space<vmem>>, vector<1x1x8x4xf32>,
      %c0_85 = arith.constant 0 : index
      %c8_86 = arith.constant 8 : index
      %124 = vector.load %arg10[%c0_85, %c8_86] : memref<8x16xf32, #tpu.memory_space<vmem>>, vector<8x4xf32>
      %125 = vector.extract_strided_slice %109 {offsets = [0, 2], sizes = [8, 1], strides = [1, 1]} : vector<8x4xf32> to vector<8x1xf32>
      %126 = vector.broadcast %125 : vector<8x1xf32> to vector<8x4xf32>
      %127 = arith.mulf %124, %126 : vector<8x4xf32>
      %c0_87 = arith.constant 0 : index
      %c0_88 = arith.constant 0 : index
      %c0_89 = arith.constant 0 : index
      %c8_90 = arith.constant 8 : index
      %128 = vector.load %arg7[%c0_87, %c0_88, %c0_89, %c8_90] : memref<1x1x8x16xf32, #tpu.memory_space<vmem>>, vector<1x1x8x4xf32>
      %129 = vector.shape_cast %128 : vector<1x1x8x4xf32> to vector<8x4xf32>
      %130 = vector.shape_cast %127 : vector<8x4xf32> to vector<1x1x8x4xf32>
      tpu.vector_store %arg7[%c0_87, %c0_88, %c0_89, %c8_90], %130 {strides = array<i32>} : memref<1x1x8x16xf32, #tpu.memory_space<vmem>>, vector<1x1x8x4xf32>,
      %c0_91 = arith.constant 0 : index
      %c12_92 = arith.constant 12 : index
      %131 = vector.load %arg10[%c0_91, %c12_92] : memref<8x16xf32, #tpu.memory_space<vmem>>, vector<8x4xf32>
      %132 = vector.extract_strided_slice %109 {offsets = [0, 3], sizes = [8, 1], strides = [1, 1]} : vector<8x4xf32> to vector<8x1xf32>
      %133 = vector.broadcast %132 : vector<8x1xf32> to vector<8x4xf32>
      %134 = arith.mulf %131, %133 : vector<8x4xf32>
      %c0_93 = arith.constant 0 : index
      %c0_94 = arith.constant 0 : index
      %c0_95 = arith.constant 0 : index
      %c12_96 = arith.constant 12 : index
      %135 = vector.load %arg7[%c0_93, %c0_94, %c0_95, %c12_96] : memref<1x1x8x16xf32, #tpu.memory_space<vmem>>, vector<1x1x8x4xf32>
      %136 = vector.shape_cast %135 : vector<1x1x8x4xf32> to vector<8x4xf32>
      %137 = vector.shape_cast %134 : vector<8x4xf32> to vector<1x1x8x4xf32>
      tpu.vector_store %arg7[%c0_93, %c0_94, %c0_95, %c12_96], %137 {strides = array<i32>} : memref<1x1x8x16xf32, #tpu.memory_space<vmem>>, vector<1x1x8x4xf32>,
    } else {
    }
    return
  }
  func.func @transform_0(%arg0: i32, %arg1: i32, %arg2: i32, %arg3: i32) -> (i32, i32, i32, i32) {
    %c0_i32 = arith.constant 0 : i32
    %c0_i32_0 = arith.constant 0 : i32
    return %arg0, %arg1, %arg2, %c0_i32 : i32, i32, i32, i32
  }
  func.func @transform_1(%arg0: i32, %arg1: i32, %arg2: i32, %arg3: i32) -> (i32, i32, i32, i32) {
    %c0_i32 = arith.constant 0 : i32
    %c0_i32_0 = arith.constant 0 : i32
    return %arg0, %arg1, %arg3, %c0_i32 : i32, i32, i32, i32
  }
  func.func @transform_2(%arg0: i32, %arg1: i32, %arg2: i32, %arg3: i32) -> (i32, i32, i32, i32) {
    %c0_i32 = arith.constant 0 : i32
    %c0_i32_0 = arith.constant 0 : i32
    return %arg0, %arg1, %arg3, %c0_i32 : i32, i32, i32, i32
  }
  func.func @transform_3(%arg0: i32, %arg1: i32, %arg2: i32, %arg3: i32) -> (i32, i32, i32, i32) {
    %c0_i32 = arith.constant 0 : i32
    %c0_i32_0 = arith.constant 0 : i32
    return %arg0, %arg1, %arg2, %c0_i32 : i32, i32, i32, i32
  }
}

module attributes {stable_mosaic.version = 11 : i64} {
  func.func @_linear_kernel(%arg0: i32, %arg1: i32, %arg2: i32, %arg3: memref<16x32xf32, #tpu.memory_space<vmem>>, %arg4: memref<32x32xf32, #tpu.memory_space<vmem>>, %arg5: memref<1x32xf32, #tpu.memory_space<vmem>>, %arg6: memref<16x32xf32, #tpu.memory_space<vmem>>, %arg7: memref<16x32xf32, #tpu.memory_space<vmem>>) attributes {dimension_semantics = [#tpu.dimension_semantics<parallel>, #tpu.dimension_semantics<parallel>, #tpu.dimension_semantics<arbitrary>], iteration_bounds = array<i64: 1, 1, 1>, scalar_prefetch = 0 : i64, scratch_operands = 1 : i64, tpu.core_type = #tpu.core_type<tc>, window_params = [{transform_indices = @transform_0, window_bounds = array<i64: 16, 32>}, {transform_indices = @transform_1, window_bounds = array<i64: 32, 32>}, {transform_indices = @transform_2, window_bounds = array<i64: 1, 32>}, {transform_indices = @transform_3, window_bounds = array<i64: 16, 32>}]} {
    %c0_i32 = arith.constant 0 : i32
    %0 = arith.cmpi eq, %arg2, %c0_i32 : i32
    %1 = arith.extui %0 : i1 to i32
    %c0_i32_0 = arith.constant 0 : i32
    %2 = arith.cmpi ne, %1, %c0_i32_0 : i32
    scf.if %2 {
      %cst_10 = arith.constant 0.000000e+00 : f32
      %12 = vector.broadcast %cst_10 : f32 to vector<16x32xf32>
      %c0_11 = arith.constant 0 : index
      %c0_12 = arith.constant 0 : index
      %13 = vector.load %arg7[%c0_11, %c0_12] : memref<16x32xf32, #tpu.memory_space<vmem>>, vector<16x32xf32>
      tpu.vector_store %arg7[%c0_11, %c0_12], %12 {strides = array<i32>} : memref<16x32xf32, #tpu.memory_space<vmem>>, vector<16x32xf32>,
    } else {
    }
    %c0 = arith.constant 0 : index
    %c0_1 = arith.constant 0 : index
    %3 = vector.load %arg7[%c0, %c0_1] : memref<16x32xf32, #tpu.memory_space<vmem>>, vector<16x32xf32>
    %c0_2 = arith.constant 0 : index
    %c0_3 = arith.constant 0 : index
    %4 = vector.load %arg3[%c0_2, %c0_3] : memref<16x32xf32, #tpu.memory_space<vmem>>, vector<16x32xf32>
    %c0_4 = arith.constant 0 : index
    %c0_5 = arith.constant 0 : index
    %5 = vector.load %arg4[%c0_4, %c0_5] : memref<32x32xf32, #tpu.memory_space<vmem>>, vector<32x32xf32>
    %cst = arith.constant dense<0.000000e+00> : vector<16x32xf32>
    %6 = tpu.matmul %4, %5, %cst {dimension_numbers = #tpu.dot_dimension_numbers<[1], [0], [0], [1], [0, 0, 1, 1], [], []>} : vector<16x32xf32>, vector<32x32xf32>, vector<16x32xf32> -> vector<16x32xf32>
    %7 = arith.addf %3, %6 : vector<16x32xf32>
    %c0_6 = arith.constant 0 : index
    %c0_7 = arith.constant 0 : index
    %8 = vector.load %arg7[%c0_6, %c0_7] : memref<16x32xf32, #tpu.memory_space<vmem>>, vector<16x32xf32>
    tpu.vector_store %arg7[%c0_6, %c0_7], %7 {strides = array<i32>} : memref<16x32xf32, #tpu.memory_space<vmem>>, vector<16x32xf32>,
    %c0_i32_8 = arith.constant 0 : i32
    %9 = arith.cmpi eq, %arg2, %c0_i32_8 : i32
    %10 = arith.extui %9 : i1 to i32
    %c0_i32_9 = arith.constant 0 : i32
    %11 = arith.cmpi ne, %10, %c0_i32_9 : i32
    scf.if %11 {
      %c0_10 = arith.constant 0 : index
      %c0_11 = arith.constant 0 : index
      %12 = vector.load %arg7[%c0_10, %c0_11] : memref<16x32xf32, #tpu.memory_space<vmem>>, vector<16x32xf32>
      %c0_12 = arith.constant 0 : index
      %c0_13 = arith.constant 0 : index
      %13 = vector.load %arg5[%c0_12, %c0_13] : memref<1x32xf32, #tpu.memory_space<vmem>>, vector<1x32xf32>
      %14 = vector.broadcast %13 : vector<1x32xf32> to vector<16x32xf32>
      %15 = arith.addf %12, %14 : vector<16x32xf32>
      %c0_14 = arith.constant 0 : index
      %c0_15 = arith.constant 0 : index
      %16 = vector.load %arg6[%c0_14, %c0_15] : memref<16x32xf32, #tpu.memory_space<vmem>>, vector<16x32xf32>
      tpu.vector_store %arg6[%c0_14, %c0_15], %15 {strides = array<i32>} : memref<16x32xf32, #tpu.memory_space<vmem>>, vector<16x32xf32>,
    } else {
    }
    return
  }
  func.func @transform_0(%arg0: i32, %arg1: i32, %arg2: i32) -> (i32, i32) {
    %c0_i32 = arith.constant 0 : i32
    return %arg0, %arg2 : i32, i32
  }
  func.func @transform_1(%arg0: i32, %arg1: i32, %arg2: i32) -> (i32, i32) {
    %c0_i32 = arith.constant 0 : i32
    return %arg2, %arg1 : i32, i32
  }
  func.func @transform_2(%arg0: i32, %arg1: i32, %arg2: i32) -> (i32, i32) {
    %c0_i32 = arith.constant 0 : i32
    %c0_i32_0 = arith.constant 0 : i32
    return %c0_i32, %arg1 : i32, i32
  }
  func.func @transform_3(%arg0: i32, %arg1: i32, %arg2: i32) -> (i32, i32) {
    %c0_i32 = arith.constant 0 : i32
    return %arg0, %arg1 : i32, i32
  }
}

</mosaic_0001>

<llo_original>
// kernel: gqa_forward.3
$region0: #{gqa_forward.3}
  #allocation0 [shape = 'u32[]', space=smem, size = 0x4, offset = 0x4, fixed_abs, tag = 'smem constant byte address 0x4 - core index']
  #allocation1 [shape = 'u32[144,128]{1,0:T(1,128)}', space=vmem, size = 0x12000, scoped, tag = 'internal scratch']
  #allocation2 [shape = 'f32[16,48]{1,0:T(8,128)}', space=vmem, size = 0x2000, scoped, tag = 'scratch operand']
  %s0 = inlined_call_operand.hbm [shape: f32[16,32], index: 0, kind: input, shape index: {}]
  %s1 = inlined_call_operand.hbm [shape: f32[32,48], index: 1, kind: input, shape index: {}]
  %s2 = inlined_call_operand.vmem [shape: f32[1,48], index: 2, kind: input, shape index: {}]
  %s3 = inlined_call_operand.vmem [shape: f32[16,48], index: 3, kind: output, shape index: {}]
  %s4 = sld [smem:[#allocation0]]
  $region38: #{gqa_forward.3} parent=0
    _
  %s6 = ssub.s32 1, %s4
  %s7 = scalar_select 0, %s6, %s4
  $region1: #{gqa_forward.3} parent=0
    #allocation3 [shape = 'u8[8192]{0}', space=vmem, size = 0x2000, scoped, tag = 'input window, operand 0, single buffered']
    #allocation4 [shape = 's32[1]{0}', space=sflag, size = 0x4, scoped, tag = 'scoped memory for gqa_forward.3']
    #allocation5 [shape = 'u8[16384]{0}', space=vmem, size = 0x4000, scoped, tag = 'input window, operand 1, single buffered']
    #allocation6 [shape = 's32[1]{0}', space=sflag, size = 0x4, scoped, tag = 'scoped memory for gqa_forward.3']
    %8 = vsyncpa [#allocation4], 0
    %9 = vsyncpa [#allocation6], 0
    // Predicated region
    $region2: #{gqa_forward.3} parent=1 // pred_check
      _
    $region3: #{gqa_forward.3} parent=1 // pred_check_branch
      %11 = sbr.rel (0) target = $region5
    $region4: #{gqa_forward.3} parent=1 // pred_region
      %s13 = ssub.s32 256, 256
      %14 = vsyncadd [#allocation4], %s13
      %s15 = sshll.u32 [#allocation3], 4
      %s16 = int_to_ptr.vmem [resolvable:$true] %s15
      %21 = dma.hbm_to_vmem [thread:$0]  %s0, 256, %s16, [#allocation4], 128, 128, 8
    $region5: #{gqa_forward.3} parent=1 // pred_fallthru
      _
    // Predicated region
    $region6: #{gqa_forward.3} parent=1 // pred_check
      _
    $region7: #{gqa_forward.3} parent=1 // pred_check_branch
      %23 = sbr.rel (0) target = $region9
    $region8: #{gqa_forward.3} parent=1 // pred_region
      %s25 = ssub.s32 512, 512
      %26 = vsyncadd [#allocation6], %s25
      %s27 = sshll.u32 [#allocation5], 4
      %s28 = int_to_ptr.vmem [resolvable:$true] %s27
      %33 = dma.hbm_to_vmem [thread:$0]  %s1, 512, %s28, [#allocation6], 128, 128, 8
    $region9: #{gqa_forward.3} parent=1 // pred_fallthru
      _
    // Predicated region
    $region10: #{gqa_forward.3} parent=1 // pred_check
      _
    $region11: #{gqa_forward.3} parent=1 // pred_check_branch
      %35 = sbr.rel (0) target = $region13
    $region12: #{gqa_forward.3} parent=1 // pred_region
      _
    $region13: #{gqa_forward.3} parent=1 // pred_fallthru
      _
    // Predicated region
    $region14: #{gqa_forward.3} parent=1 // pred_check
      _
    $region15: #{gqa_forward.3} parent=1 // pred_check_branch
      %37 = sbr.rel (0) target = $region17
    $region16: #{gqa_forward.3} parent=1 // pred_region
      %38 = dma.done [#allocation4], 256
    $region17: #{gqa_forward.3} parent=1 // pred_fallthru
      _
    // Predicated region
    $region18: #{gqa_forward.3} parent=1 // pred_check
      _
    $region19: #{gqa_forward.3} parent=1 // pred_check_branch
      %40 = sbr.rel (0) target = $region21
    $region20: #{gqa_forward.3} parent=1 // pred_region
      %41 = dma.done [#allocation6], 512
    $region21: #{gqa_forward.3} parent=1 // pred_fallthru
      _
    %p42 = scmp.eq.s32.totalorder 0, 0
    // Predicated region
    $region22: #{gqa_forward.3} parent=1 // pred_check
      %p43 = pneg %p42
    $region23: #{gqa_forward.3} parent=1 // pred_check_branch
      %45 = sbr.rel (%p43) target = $region25
    $region24: #{gqa_forward.3} parent=1 // pred_region
      %vm46 = vcmask 392192
      %47 = vst.msk [vmem:[#allocation2] sm:$0xff] %vm46, 0.0
      %48 = vst.msk [vmem:[#allocation2 + $0x8] sm:$0xff] %vm46, 0.0
    $region25: #{gqa_forward.3} parent=1 // pred_fallthru
      _
    %v49 = vld [vmem:[#allocation2] sm:$0xff]
    %v50 = vld [vmem:[#allocation2 + $0x8] sm:$0xff]
    %v51 = vld [vmem:[#allocation3] sm:$0xff]
    %v52 = vld [vmem:[#allocation3 + $0x8] sm:$0xff]
    %v53 = vld [vmem:[#allocation5] sm:$0xff]
    %v54 = vld [vmem:[#allocation5 + $0x8] sm:$0xff]
    %v55 = vld [vmem:[#allocation5 + $0x10] sm:$0xff]
    %v56 = vld [vmem:[#allocation5 + $0x18] sm:$0xff]
    %vm57 = vcmask 261120
    %v59 = vsel %vm57, %v51, 0
    %v62 = vsel %vm57, %v52, 0
    %64 = vmatprep.subr.mxu0 0.0
    %65 = vmatpush1.msra.mxu0 0.0
    %66 = vmatprep.subr.mxu0 0.0
    %67 = vmatpush1.msra.mxu0 0.0
    %68 = vmatprep.subr.mxu0 0.0
    %69 = vmatpush1.msra.mxu0 0.0
    %70 = vmatprep.subr.mxu0 0.0
    %71 = vmatpush1.msra.mxu0 0.0
    %72 = vmatprep.subr.mxu0 0.0
    %73 = vmatpush1.msra.mxu0 0.0
    %74 = vmatprep.subr.mxu0 0.0
    %75 = vmatpush1.msra.mxu0 0.0
    %76 = vmatprep.subr.mxu0 0.0
    %77 = vmatpush1.msra.mxu0 0.0
    %78 = vmatprep.subr.mxu0 0.0
    %79 = vmatpush1.msra.mxu0 0.0
    %80 = vmatprep.subr.mxu0 0.0
    %81 = vmatpush1.msra.mxu0 0.0
    %82 = vmatprep.subr.mxu0 0.0
    %83 = vmatpush1.msra.mxu0 0.0
    %84 = vmatprep.subr.mxu0 0.0
    %85 = vmatpush1.msra.mxu0 0.0
    %86 = vmatprep.subr.mxu0 0.0
    %87 = vmatpush1.msra.mxu0 0.0
    %88 = vmatprep.subr.mxu0 0.0
    %89 = vmatpush1.msra.mxu0 %v56
    %90 = vmatprep.subr.mxu0 0.0
    %91 = vmatpush1.msra.mxu0 %v55
    %92 = vmatprep.subr.mxu0 0.0
    %93 = vmatpush1.msra.mxu0 %v54
    %94 = vmatprep.subr.mxu0 0.0
    %95 = vmatpush1.msra.mxu0 %v53
    %96 = vmatprep.subr.mxu0 0.0
    %97 = vmatpush2.msra.mxu0 0.0
    %98 = vmatprep.subr.mxu0 0.0
    %99 = vmatpush2.msra.mxu0 0.0
    %100 = vmatprep.subr.mxu0 0.0
    %101 = vmatpush2.msra.mxu0 0.0
    %102 = vmatprep.subr.mxu0 0.0
    %103 = vmatpush2.msra.mxu0 0.0
    %104 = vmatprep.subr.mxu0 0.0
    %105 = vmatpush2.msra.mxu0 0.0
    %106 = vmatprep.subr.mxu0 0.0
    %107 = vmatpush2.msra.mxu0 0.0
    %108 = vmatprep.subr.mxu0 0.0
    %109 = vmatpush2.msra.mxu0 0.0
    %110 = vmatprep.subr.mxu0 0.0
    %111 = vmatpush2.msra.mxu0 0.0
    %112 = vmatprep.subr.mxu0 0.0
    %113 = vmatpush2.msra.mxu0 0.0
    %114 = vmatprep.subr.mxu0 0.0
    %115 = vmatpush2.msra.mxu0 0.0
    %116 = vmatprep.subr.mxu0 0.0
    %117 = vmatpush2.msra.mxu0 0.0
    %118 = vmatprep.subr.mxu0 0.0
    %119 = vmatpush2.msra.mxu0 0.0
    %120 = vmatprep.subr.mxu0 0.0
    %121 = vmatpush2.msra.mxu0 0.0
    %122 = vmatprep.subr.mxu0 0.0
    %123 = vmatpush2.msra.mxu0 0.0
    %124 = vmatprep.subr.mxu0 0.0
    %125 = vmatpush2.msra.mxu0 0.0
    %126 = vmatprep.subr.mxu0 0.0
    %127 = vmatpush2.msra.mxu0 0.0
    %128 = vmatprep.mubr.f32.mxu0 0.0
    %129 = vmatmul.mubr.f32.gmra.mxu0 %v59
    %v130 = vpop.f32.mrf.mxu0
    %v131 = vadd.f32 0.0, %v130
    %v132 = vpop.f32.mrf.mxu0
    %133 = vmatprep.mubr.f32.mxu0 0.0
    %134 = vmatmul.mubr.f32.gmra.mxu0 %v62
    %v135 = vpop.f32.mrf.mxu0
    %v136 = vadd.f32 0.0, %v135
    %v137 = vpop.f32.mrf.mxu0
    %138 = vdwg.mxu0
    %v139 = vadd.f32 %v49, %v131
    %v140 = vadd.f32 %v50, %v136
    %vm141 = vcmask 392192
    %142 = vst.msk [vmem:[#allocation2] sm:$0xff] %vm141, %v139
    %143 = vst.msk [vmem:[#allocation2 + $0x8] sm:$0xff] %vm141, %v140
    // Predicated region
    $region26: #{gqa_forward.3} parent=1 // pred_check
      %p144 = pneg %p42
    $region27: #{gqa_forward.3} parent=1 // pred_check_branch
      %146 = sbr.rel (%p144) target = $region29
    $region28: #{gqa_forward.3} parent=1 // pred_region
      %v147 = vld [vmem:[#allocation2] sm:$0xff]
      %v148 = vld [vmem:[#allocation2 + $0x8] sm:$0xff]
      %v149 = vld [vmem:[%s2] sm:$0x1]
      %v151 = vlaneseq
      %v152 = vshrl.u32 %v151, 7
      %v153 = vsub.s32 0, %v152
      %v154 = vrot.slane %v149, %v153
      %v156 = vadd.f32 %v147, %v154
      %v157 = vadd.f32 %v148, %v154
      %158 = vst.msk [vmem:[%s3] sm:$0xff] %vm141, %v156
      %159 = vst.msk [vmem:[%s3 + $0x8] sm:$0xff] %vm141, %v157
    $region29: #{gqa_forward.3} parent=1 // pred_fallthru
      _
    // Predicated region
    $region30: #{gqa_forward.3} parent=1 // pred_check
      _
    $region31: #{gqa_forward.3} parent=1 // pred_check_branch
      %161 = sbr.rel (0) target = $region33
    $region32: #{gqa_forward.3} parent=1 // pred_region
      _
    $region33: #{gqa_forward.3} parent=1 // pred_fallthru
      _
    // Predicated region
    $region34: #{gqa_forward.3} parent=1 // pred_check
      _
    $region35: #{gqa_forward.3} parent=1 // pred_check_branch
      %163 = sbr.rel (0) target = $region37
    $region36: #{gqa_forward.3} parent=1 // pred_region
      _
    $region37: #{gqa_forward.3} parent=1 // pred_fallthru
      _
    %164 = vsyncpa [#allocation4], 1
    %165 = vsyncpa [#allocation6], 1

// kernel: gqa_forward.5
$region0: #{gqa_forward.5}
  #allocation0 [shape = 'u32[]', space=smem, size = 0x4, offset = 0x4, fixed_abs, tag = 'smem constant byte address 0x4 - core index']
  #allocation1 [shape = 'u32[144,128]{1,0:T(1,128)}', space=vmem, size = 0x12000, scoped, tag = 'internal scratch']
  #allocation2 [shape = 'f32[16,32]{1,0:T(8,128)}', space=vmem, size = 0x2000, scoped, tag = 'scratch operand']
  %s0 = inlined_call_operand.vmem [shape: f32[16,32], index: 0, kind: input, shape index: {}]
  %s1 = inlined_call_operand.vmem [shape: f32[32,32], index: 1, kind: input, shape index: {}]
  %s2 = inlined_call_operand.vmem [shape: f32[1,32], index: 2, kind: input, shape index: {}]
  %s3 = inlined_call_operand.hbm [shape: f32[16,32], index: 3, kind: output, shape index: {}]
  %s4 = sld [smem:[#allocation0]]
  $region30: #{gqa_forward.5} parent=0
    _
  %s6 = ssub.s32 1, %s4
  %s7 = scalar_select 0, %s6, %s4
  $region1: #{gqa_forward.5} parent=0
    #allocation3 [shape = 'u8[8192]{0}', space=vmem, size = 0x2000, scoped, tag = 'output window, operand 0, single buffered']
    #allocation4 [shape = 's32[1]{0}', space=sflag, size = 0x4, scoped, tag = 'scoped memory for gqa_forward.5']
    %8 = vsyncpa [#allocation4], 0
    // Predicated region
    $region2: #{gqa_forward.5} parent=1 // pred_check
      _
    $region3: #{gqa_forward.5} parent=1 // pred_check_branch
      %10 = sbr.rel (0) target = $region5
    $region4: #{gqa_forward.5} parent=1 // pred_region
      _
    $region5: #{gqa_forward.5} parent=1 // pred_fallthru
      _
    // Predicated region
    $region6: #{gqa_forward.5} parent=1 // pred_check
      _
    $region7: #{gqa_forward.5} parent=1 // pred_check_branch
      %12 = sbr.rel (0) target = $region9
    $region8: #{gqa_forward.5} parent=1 // pred_region
      _
    $region9: #{gqa_forward.5} parent=1 // pred_fallthru
      _
    // Predicated region
    $region10: #{gqa_forward.5} parent=1 // pred_check
      _
    $region11: #{gqa_forward.5} parent=1 // pred_check_branch
      %14 = sbr.rel (0) target = $region13
    $region12: #{gqa_forward.5} parent=1 // pred_region
      _
    $region13: #{gqa_forward.5} parent=1 // pred_fallthru
      _
    %p15 = scmp.eq.s32.totalorder 0, 0
    // Predicated region
    $region14: #{gqa_forward.5} parent=1 // pred_check
      %p16 = pneg %p15
    $region15: #{gqa_forward.5} parent=1 // pred_check_branch
      %18 = sbr.rel (%p16) target = $region17
    $region16: #{gqa_forward.5} parent=1 // pred_region
      %vm19 = vcmask 261120
      %20 = vst.msk [vmem:[#allocation2] sm:$0xff] %vm19, 0.0
      %21 = vst.msk [vmem:[#allocation2 + $0x8] sm:$0xff] %vm19, 0.0
    $region17: #{gqa_forward.5} parent=1 // pred_fallthru
      _
    %v22 = vld [vmem:[#allocation2] sm:$0xff]
    %v23 = vld [vmem:[#allocation2 + $0x8] sm:$0xff]
    %v24 = vld [vmem:[%s0] sm:$0xff]
    %v25 = vld [vmem:[%s0 + $0x8] sm:$0xff]
    %v26 = vld [vmem:[%s1] sm:$0xff]
    %v27 = vld [vmem:[%s1 + $0x8] sm:$0xff]
    %v28 = vld [vmem:[%s1 + $0x10] sm:$0xff]
    %v29 = vld [vmem:[%s1 + $0x18] sm:$0xff]
    %vm30 = vcmask 261120
    %v32 = vsel %vm30, %v24, 0
    %v35 = vsel %vm30, %v25, 0
    %37 = vmatprep.subr.mxu0 0.0
    %38 = vmatpush1.msra.mxu0 0.0
    %39 = vmatprep.subr.mxu0 0.0
    %40 = vmatpush1.msra.mxu0 0.0
    %41 = vmatprep.subr.mxu0 0.0
    %42 = vmatpush1.msra.mxu0 0.0
    %43 = vmatprep.subr.mxu0 0.0
    %44 = vmatpush1.msra.mxu0 0.0
    %45 = vmatprep.subr.mxu0 0.0
    %46 = vmatpush1.msra.mxu0 0.0
    %47 = vmatprep.subr.mxu0 0.0
    %48 = vmatpush1.msra.mxu0 0.0
    %49 = vmatprep.subr.mxu0 0.0
    %50 = vmatpush1.msra.mxu0 0.0
    %51 = vmatprep.subr.mxu0 0.0
    %52 = vmatpush1.msra.mxu0 0.0
    %53 = vmatprep.subr.mxu0 0.0
    %54 = vmatpush1.msra.mxu0 0.0
    %55 = vmatprep.subr.mxu0 0.0
    %56 = vmatpush1.msra.mxu0 0.0
    %57 = vmatprep.subr.mxu0 0.0
    %58 = vmatpush1.msra.mxu0 0.0
    %59 = vmatprep.subr.mxu0 0.0
    %60 = vmatpush1.msra.mxu0 0.0
    %61 = vmatprep.subr.mxu0 0.0
    %62 = vmatpush1.msra.mxu0 %v29
    %63 = vmatprep.subr.mxu0 0.0
    %64 = vmatpush1.msra.mxu0 %v28
    %65 = vmatprep.subr.mxu0 0.0
    %66 = vmatpush1.msra.mxu0 %v27
    %67 = vmatprep.subr.mxu0 0.0
    %68 = vmatpush1.msra.mxu0 %v26
    %69 = vmatprep.subr.mxu0 0.0
    %70 = vmatpush2.msra.mxu0 0.0
    %71 = vmatprep.subr.mxu0 0.0
    %72 = vmatpush2.msra.mxu0 0.0
    %73 = vmatprep.subr.mxu0 0.0
    %74 = vmatpush2.msra.mxu0 0.0
    %75 = vmatprep.subr.mxu0 0.0
    %76 = vmatpush2.msra.mxu0 0.0
    %77 = vmatprep.subr.mxu0 0.0
    %78 = vmatpush2.msra.mxu0 0.0
    %79 = vmatprep.subr.mxu0 0.0
    %80 = vmatpush2.msra.mxu0 0.0
    %81 = vmatprep.subr.mxu0 0.0
    %82 = vmatpush2.msra.mxu0 0.0
    %83 = vmatprep.subr.mxu0 0.0
    %84 = vmatpush2.msra.mxu0 0.0
    %85 = vmatprep.subr.mxu0 0.0
    %86 = vmatpush2.msra.mxu0 0.0
    %87 = vmatprep.subr.mxu0 0.0
    %88 = vmatpush2.msra.mxu0 0.0
    %89 = vmatprep.subr.mxu0 0.0
    %90 = vmatpush2.msra.mxu0 0.0
    %91 = vmatprep.subr.mxu0 0.0
    %92 = vmatpush2.msra.mxu0 0.0
    %93 = vmatprep.subr.mxu0 0.0
    %94 = vmatpush2.msra.mxu0 0.0
    %95 = vmatprep.subr.mxu0 0.0
    %96 = vmatpush2.msra.mxu0 0.0
    %97 = vmatprep.subr.mxu0 0.0
    %98 = vmatpush2.msra.mxu0 0.0
    %99 = vmatprep.subr.mxu0 0.0
    %100 = vmatpush2.msra.mxu0 0.0
    %101 = vmatprep.mubr.f32.mxu0 0.0
    %102 = vmatmul.mubr.f32.gmra.mxu0 %v32
    %v103 = vpop.f32.mrf.mxu0
    %v104 = vadd.f32 0.0, %v103
    %v105 = vpop.f32.mrf.mxu0
    %106 = vmatprep.mubr.f32.mxu0 0.0
    %107 = vmatmul.mubr.f32.gmra.mxu0 %v35
    %v108 = vpop.f32.mrf.mxu0
    %v109 = vadd.f32 0.0, %v108
    %v110 = vpop.f32.mrf.mxu0
    %111 = vdwg.mxu0
    %v112 = vadd.f32 %v22, %v104
    %v113 = vadd.f32 %v23, %v109
    %114 = vst.msk [vmem:[#allocation2] sm:$0xff] %vm30, %v112
    %115 = vst.msk [vmem:[#allocation2 + $0x8] sm:$0xff] %vm30, %v113
    // Predicated region
    $region18: #{gqa_forward.5} parent=1 // pred_check
      %p116 = pneg %p15
    $region19: #{gqa_forward.5} parent=1 // pred_check_branch
      %118 = sbr.rel (%p116) target = $region21
    $region20: #{gqa_forward.5} parent=1 // pred_region
      %v119 = vld [vmem:[#allocation2] sm:$0xff]
      %v120 = vld [vmem:[#allocation2 + $0x8] sm:$0xff]
      %v121 = vld [vmem:[%s2] sm:$0x1]
      %v123 = vlaneseq
      %v124 = vshrl.u32 %v123, 7
      %v125 = vsub.s32 0, %v124
      %v126 = vrot.slane %v121, %v125
      %v128 = vadd.f32 %v119, %v126
      %v129 = vadd.f32 %v120, %v126
      %130 = vst.msk [vmem:[#allocation3] sm:$0xff] %vm30, %v128
      %131 = vst.msk [vmem:[#allocation3 + $0x8] sm:$0xff] %vm30, %v129
    $region21: #{gqa_forward.5} parent=1 // pred_fallthru
      _
    // Predicated region
    $region22: #{gqa_forward.5} parent=1 // pred_check
      _
    $region23: #{gqa_forward.5} parent=1 // pred_check_branch
      %133 = sbr.rel (0) target = $region25
    $region24: #{gqa_forward.5} parent=1 // pred_region
      %s135 = ssub.s32 256, 256
      %136 = vsyncadd [#allocation4], %s135
      %s137 = sshll.u32 [#allocation3], 4
      %s138 = int_to_ptr.vmem [resolvable:$true] %s137
      %143 = dma.vmem_to_hbm [thread:$0]  %s138, 256, %s3, [#allocation4], 128, 128, 8
    $region25: #{gqa_forward.5} parent=1 // pred_fallthru
      _
    // Predicated region
    $region26: #{gqa_forward.5} parent=1 // pred_check
      _
    $region27: #{gqa_forward.5} parent=1 // pred_check_branch
      %145 = sbr.rel (0) target = $region29
    $region28: #{gqa_forward.5} parent=1 // pred_region
      %146 = dma.done [#allocation4], 256
    $region29: #{gqa_forward.5} parent=1 // pred_fallthru
      _
    %147 = vsyncpa [#allocation4], 1

// kernel: gqa_forward.4
$region0: #{gqa_forward.4}
  #allocation0 [shape = 'u32[]', space=smem, size = 0x4, offset = 0x4, fixed_abs, tag = 'smem constant byte address 0x4 - core index']
  #allocation1 [shape = 'u32[144,128]{1,0:T(1,128)}', space=vmem, size = 0x12000, scoped, tag = 'internal scratch']
  #allocation2 [shape = 'f32[8,4]{1,0:T(8,128)}', space=vmem, size = 0x1000, scoped, tag = 'scratch operand']
  #allocation3 [shape = 'f32[8,4]{1,0:T(8,128)}', space=vmem, size = 0x1000, scoped, tag = 'scratch operand']
  #allocation4 [shape = 'f32[8,16]{1,0:T(8,128)}', space=vmem, size = 0x1000, scoped, tag = 'scratch operand']
  %s0 = inlined_call_operand.vmem [shape: f32[2,2,8,16], index: 0, kind: input, shape index: {}]
  %s1 = inlined_call_operand.vmem [shape: f32[2,2,8,4], index: 1, kind: input, shape index: {}]
  %s2 = inlined_call_operand.vmem [shape: f32[2,2,8,4], index: 2, kind: input, shape index: {}]
  %s3 = inlined_call_operand.vmem [shape: f32[2,2,8,16], index: 3, kind: output, shape index: {}]
  %s4 = sld [smem:[#allocation0]]
  $region53: #{gqa_forward.4} parent=0
    _
  %s6 = ssub.s32 1, %s4
  %s7 = scalar_select 0, %s6, %s4
  loop: start=0, step=1, limit=6
  $region2: #{gqa_forward.4} parent=0 // loop_pre_header
    _
  $region3: #{gqa_forward.4} parent=0 // loop_header
    %s9 = sphi 0, %s13
    %p10 = scmp.ge.s32.totalorder %s9, 6
    %s16 = sphi 0, %s42
    %s17 = sphi 0, %s38
    %s18 = sphi 0, %s34
    %s19 = sphi 0, %s30
    %s20 = sphi 0, %s16
    %s21 = sphi 0, %s17
    %s22 = sphi 0, %s18
    %s23 = sphi 0, %s19
    %s24 = sphi 0, %s20
    %s25 = sphi 0, %s21
    %s26 = sphi 0, %s22
    %s27 = sphi 0, %s23
    %s49 = sphi 0, %s51
    %s52 = sphi 0, %s49
    %s53 = sphi 0, %s52
    %s69 = sphi 0, %s53
    %s79 = sphi 0, %s81
    %s82 = sphi 0, %s79
    %s83 = sphi 0, %s82
    %s99 = sphi 0, %s83
    %s109 = sphi 0, %s111
    %s112 = sphi 0, %s109
    %s113 = sphi 0, %s112
    %s129 = sphi 0, %s113
    %s139 = sphi 0, %s141
    %s142 = sphi 0, %s139
    %s143 = sphi 0, %s142
    %s159 = sphi 0, %s143
  $region4: #{gqa_forward.4} parent=0 // loop_header_branch
    %12 = sbr.rel (%p10) target = $region8
  $region5: #{gqa_forward.4} parent=0 // loop_body
    %s14 = ssub.s32 %s9, 1
    %s15 = ssub.s32 %s9, 2
    %s28 = sadd.s32 1, %s19
    %p29 = scmp.ge.s32.totalorder %s28, 1
    %s30 = scalar_select %p29, 0, %s28
    %s31 = sadd.s32 1, %s18
    %s32 = scalar_select %p29, %s31, %s18
    %p33 = scmp.ge.s32.totalorder %s32, 1
    %s34 = scalar_select %p33, 0, %s32
    %s35 = sadd.s32 1, %s17
    %s36 = scalar_select %p33, %s35, %s17
    %p37 = scmp.ge.s32.totalorder %s36, 2
    %s38 = scalar_select %p37, 0, %s36
    %s39 = sadd.s32 1, %s16
    %s40 = scalar_select %p37, %s39, %s16
    %p41 = scmp.ge.s32.totalorder %s40, 2
    %s42 = scalar_select %p41, 0, %s40
    %s43 = ssub.s32 %s16, %s42
    %s44 = ssub.s32 %s17, %s38
    %s45 = sor.u32 %s43, %s44
    %s46 = ssub.s32 %s18, %s34
    %s47 = sor.u32 %s45, %s46
    %p48 = scmp.eq.s32.totalorder %s47, 0
    %s50 = sadd.s32 %s49, 1
    %s51 = scalar_select %p48, %s49, %s50
    %p54 = pneg %p48
    %p55 = scmp.eq.s32.totalorder %s9, 3
    %p56 = por %p54, %p55
    %p57 = scmp.ne.s32.totalorder %s49, %s52
    %p58 = scmp.eq.s32.totalorder %s9, 0
    %p59 = por %p57, %p58
    %p60 = scmp.ne.s32.totalorder %s49, %s52
    %p61 = scmp.eq.s32.totalorder %s14, 3
    %p62 = por %p60, %p61
    %p63 = scmp.ne.s32.totalorder %s52, %s53
    %p64 = scmp.eq.s32.totalorder %s14, 0
    %p65 = por %p63, %p64
    %p66 = scmp.ne.s32.totalorder %s52, %s53
    %p67 = scmp.eq.s32.totalorder %s15, 3
    %p68 = por %p66, %p67
    %p70 = scmp.ne.s32.totalorder %s53, %s69
    %p71 = scmp.eq.s32.totalorder %s15, 0
    %p72 = por %p70, %p71
    %s73 = ssub.s32 %s16, %s42
    %s74 = ssub.s32 %s17, %s38
    %s75 = sor.u32 %s73, %s74
    %s76 = ssub.s32 %s19, %s30
    %s77 = sor.u32 %s75, %s76
    %p78 = scmp.eq.s32.totalorder %s77, 0
    %s80 = sadd.s32 %s79, 1
    %s81 = scalar_select %p78, %s79, %s80
    %p84 = pneg %p78
    %p85 = scmp.eq.s32.totalorder %s9, 3
    %p86 = por %p84, %p85
    %p87 = scmp.ne.s32.totalorder %s79, %s82
    %p88 = scmp.eq.s32.totalorder %s9, 0
    %p89 = por %p87, %p88
    %p90 = scmp.ne.s32.totalorder %s79, %s82
    %p91 = scmp.eq.s32.totalorder %s14, 3
    %p92 = por %p90, %p91
    %p93 = scmp.ne.s32.totalorder %s82, %s83
    %p94 = scmp.eq.s32.totalorder %s14, 0
    %p95 = por %p93, %p94
    %p96 = scmp.ne.s32.totalorder %s82, %s83
    %p97 = scmp.eq.s32.totalorder %s15, 3
    %p98 = por %p96, %p97
    %p100 = scmp.ne.s32.totalorder %s83, %s99
    %p101 = scmp.eq.s32.totalorder %s15, 0
    %p102 = por %p100, %p101
    %s103 = ssub.s32 %s16, %s42
    %s104 = ssub.s32 %s17, %s38
    %s105 = sor.u32 %s103, %s104
    %s106 = ssub.s32 %s19, %s30
    %s107 = sor.u32 %s105, %s106
    %p108 = scmp.eq.s32.totalorder %s107, 0
    %s110 = sadd.s32 %s109, 1
    %s111 = scalar_select %p108, %s109, %s110
    %p114 = pneg %p108
    %p115 = scmp.eq.s32.totalorder %s9, 3
    %p116 = por %p114, %p115
    %p117 = scmp.ne.s32.totalorder %s109, %s112
    %p118 = scmp.eq.s32.totalorder %s9, 0
    %p119 = por %p117, %p118
    %p120 = scmp.ne.s32.totalorder %s109, %s112
    %p121 = scmp.eq.s32.totalorder %s14, 3
    %p122 = por %p120, %p121
    %p123 = scmp.ne.s32.totalorder %s112, %s113
    %p124 = scmp.eq.s32.totalorder %s14, 0
    %p125 = por %p123, %p124
    %p126 = scmp.ne.s32.totalorder %s112, %s113
    %p127 = scmp.eq.s32.totalorder %s15, 3
    %p128 = por %p126, %p127
    %p130 = scmp.ne.s32.totalorder %s113, %s129
    %p131 = scmp.eq.s32.totalorder %s15, 0
    %p132 = por %p130, %p131
    %s133 = ssub.s32 %s16, %s42
    %s134 = ssub.s32 %s17, %s38
    %s135 = sor.u32 %s133, %s134
    %s136 = ssub.s32 %s18, %s34
    %s137 = sor.u32 %s135, %s136
    %p138 = scmp.eq.s32.totalorder %s137, 0
    %s140 = sadd.s32 %s139, 1
    %s141 = scalar_select %p138, %s139, %s140
    %p144 = pneg %p138
    %p145 = scmp.eq.s32.totalorder %s9, 3
    %p146 = por %p144, %p145
    %p147 = scmp.ne.s32.totalorder %s139, %s142
    %p148 = scmp.eq.s32.totalorder %s9, 0
    %p149 = por %p147, %p148
    %p150 = scmp.ne.s32.totalorder %s139, %s142
    %p151 = scmp.eq.s32.totalorder %s14, 3
    %p152 = por %p150, %p151
    %p153 = scmp.ne.s32.totalorder %s142, %s143
    %p154 = scmp.eq.s32.totalorder %s14, 0
    %p155 = por %p153, %p154
    %p156 = scmp.ne.s32.totalorder %s142, %s143
    %p157 = scmp.eq.s32.totalorder %s15, 3
    %p158 = por %p156, %p157
    %p160 = scmp.ne.s32.totalorder %s143, %s159
    %p161 = scmp.eq.s32.totalorder %s15, 0
    %p162 = por %p160, %p161
    %p163 = scmp.le.s32.totalorder 1, %s9
    %p164 = scmp.lt.s32.totalorder %s9, 5
    %p165 = pnand %p163, %p164
    %p166 = pneg %p165
    // Predicated region
    $region9: #{gqa_forward.4} parent=5 // pred_check
      _
    $region10: #{gqa_forward.4} parent=5 // pred_check_branch
      %168 = sbr.rel (%p165) target = $region12
    $region11: #{gqa_forward.4} parent=5 // pred_region
      %s169 = ssub.s32 %s9, 1
    $region12: #{gqa_forward.4} parent=5 // pred_fallthru
      _
    %p170 = scmp.lt.s32.totalorder %s9, 4
    // Predicated region
    $region13: #{gqa_forward.4} parent=5 // pred_check
      %p171 = pneg %p170
    $region14: #{gqa_forward.4} parent=5 // pred_check_branch
      %173 = sbr.rel (%p171) target = $region16
    $region15: #{gqa_forward.4} parent=5 // pred_region
      // Predicated region
      $region17: #{gqa_forward.4} parent=15 // pred_check
        %p174 = pneg %p59
      $region18: #{gqa_forward.4} parent=15 // pred_check_branch
        %176 = sbr.rel (%p174) target = $region20
      $region19: #{gqa_forward.4} parent=15 // pred_region
        %p177 = scmp.lt.s32.totalorder %s16, 1
        %s178 = scalar_select %p177, %s16, 1
        %p179 = scmp.lt.s32.totalorder %s17, 1
        %s180 = scalar_select %p179, %s17, 1
        %p181 = scmp.lt.s32.totalorder %s18, 0
        %s182 = scalar_select %p181, %s18, 0
        %s183 = sadd.s32 %s182, %s180
        %s184 = smul.addr %s178, 2
        %s185 = sadd.s32 %s183, %s184
        %s186 = smul.addr %s185, 8
        %s187 = scalar_lea.vmem %s0, %s186
      $region20: #{gqa_forward.4} parent=15 // pred_fallthru
        _
      // Predicated region
      $region21: #{gqa_forward.4} parent=15 // pred_check
        %p188 = pneg %p89
      $region22: #{gqa_forward.4} parent=15 // pred_check_branch
        %190 = sbr.rel (%p188) target = $region24
      $region23: #{gqa_forward.4} parent=15 // pred_region
        %p191 = scmp.lt.s32.totalorder %s16, 1
        %s192 = scalar_select %p191, %s16, 1
        %p193 = scmp.lt.s32.totalorder %s17, 1
        %s194 = scalar_select %p193, %s17, 1
        %p195 = scmp.lt.s32.totalorder %s19, 0
        %s196 = scalar_select %p195, %s19, 0
        %s197 = sadd.s32 %s196, %s194
        %s198 = smul.addr %s192, 2
        %s199 = sadd.s32 %s197, %s198
        %s200 = smul.addr %s199, 8
        %s201 = scalar_lea.vmem %s1, %s200
      $region24: #{gqa_forward.4} parent=15 // pred_fallthru
        _
      // Predicated region
      $region25: #{gqa_forward.4} parent=15 // pred_check
        %p202 = pneg %p119
      $region26: #{gqa_forward.4} parent=15 // pred_check_branch
        %204 = sbr.rel (%p202) target = $region28
      $region27: #{gqa_forward.4} parent=15 // pred_region
        %p205 = scmp.lt.s32.totalorder %s16, 1
        %s206 = scalar_select %p205, %s16, 1
        %p207 = scmp.lt.s32.totalorder %s17, 1
        %s208 = scalar_select %p207, %s17, 1
        %p209 = scmp.lt.s32.totalorder %s19, 0
        %s210 = scalar_select %p209, %s19, 0
        %s211 = sadd.s32 %s210, %s208
        %s212 = smul.addr %s206, 2
        %s213 = sadd.s32 %s211, %s212
        %s214 = smul.addr %s213, 8
        %s215 = scalar_lea.vmem %s2, %s214
      $region28: #{gqa_forward.4} parent=15 // pred_fallthru
        _
    $region16: #{gqa_forward.4} parent=5 // pred_fallthru
      _
    %p216 = scmp.le.s32.totalorder 1, %s9
    %p217 = scmp.lt.s32.totalorder %s9, 5
    %p218 = pnand %p216, %p217
    %p219 = pneg %p218
    // Predicated region
    $region29: #{gqa_forward.4} parent=5 // pred_check
      _
    $region30: #{gqa_forward.4} parent=5 // pred_check_branch
      %221 = sbr.rel (%p218) target = $region32
    $region31: #{gqa_forward.4} parent=5 // pred_region
      %s222 = ssub.s32 %s9, 1
      %p223 = scmp.lt.s32.totalorder %s20, 1
      %s224 = scalar_select %p223, %s20, 1
      %p225 = scmp.lt.s32.totalorder %s21, 1
      %s226 = scalar_select %p225, %s21, 1
      %p227 = scmp.lt.s32.totalorder %s22, 0
      %s228 = scalar_select %p227, %s22, 0
      %s229 = sadd.s32 %s228, %s226
      %s230 = smul.addr %s224, 2
      %s231 = sadd.s32 %s229, %s230
      %s232 = smul.addr %s231, 8
      %s233 = scalar_lea.vmem %s0, %s232
      %p234 = pneg %p65
      %p235 = pneg %p62
      %p236 = scmp.lt.s32.totalorder %s20, 1
      %s237 = scalar_select %p236, %s20, 1
      %p238 = scmp.lt.s32.totalorder %s21, 1
      %s239 = scalar_select %p238, %s21, 1
      %p240 = scmp.lt.s32.totalorder %s23, 0
      %s241 = scalar_select %p240, %s23, 0
      %s242 = sadd.s32 %s241, %s239
      %s243 = smul.addr %s237, 2
      %s244 = sadd.s32 %s242, %s243
      %s245 = smul.addr %s244, 8
      %s246 = scalar_lea.vmem %s1, %s245
      %p247 = pneg %p95
      %p248 = pneg %p92
      %p249 = scmp.lt.s32.totalorder %s20, 1
      %s250 = scalar_select %p249, %s20, 1
      %p251 = scmp.lt.s32.totalorder %s21, 1
      %s252 = scalar_select %p251, %s21, 1
      %p253 = scmp.lt.s32.totalorder %s23, 0
      %s254 = scalar_select %p253, %s23, 0
      %s255 = sadd.s32 %s254, %s252
      %s256 = smul.addr %s250, 2
      %s257 = sadd.s32 %s255, %s256
      %s258 = smul.addr %s257, 8
      %s259 = scalar_lea.vmem %s2, %s258
      %p260 = pneg %p125
      %p261 = pneg %p122
      %p262 = pneg %p155
      %p263 = pneg %p152
      %p264 = scmp.lt.s32.totalorder %s20, 1
      %s265 = scalar_select %p264, %s20, 1
      %p266 = scmp.lt.s32.totalorder %s21, 1
      %s267 = scalar_select %p266, %s21, 1
      %p268 = scmp.lt.s32.totalorder %s22, 0
      %s269 = scalar_select %p268, %s22, 0
      %s270 = sadd.s32 %s269, %s267
      %s271 = smul.addr %s265, 2
      %s272 = sadd.s32 %s270, %s271
      %s273 = smul.addr %s272, 8
      %s274 = scalar_lea.vmem %s3, %s273
      %p275 = scmp.lt.s32.totalorder %s20, 1
      %s276 = scalar_select %p275, %s20, 1
      %p277 = scmp.lt.s32.totalorder %s21, 1
      %s278 = scalar_select %p277, %s21, 1
      %p279 = scmp.lt.s32.totalorder %s22, 0
      %s280 = scalar_select %p279, %s22, 0
      %s281 = sadd.s32 %s280, %s278
      %s282 = smul.addr %s276, 2
      %s283 = sadd.s32 %s281, %s282
      %s284 = smul.addr %s283, 8
      %s285 = scalar_lea.vmem %s0, %s284
      %p286 = scmp.lt.s32.totalorder %s20, 1
      %s287 = scalar_select %p286, %s20, 1
      %p288 = scmp.lt.s32.totalorder %s21, 1
      %s289 = scalar_select %p288, %s21, 1
      %p290 = scmp.lt.s32.totalorder %s23, 0
      %s291 = scalar_select %p290, %s23, 0
      %s292 = sadd.s32 %s291, %s289
      %s293 = smul.addr %s287, 2
      %s294 = sadd.s32 %s292, %s293
      %s295 = smul.addr %s294, 8
      %s296 = scalar_lea.vmem %s1, %s295
      %p297 = scmp.lt.s32.totalorder %s20, 1
      %s298 = scalar_select %p297, %s20, 1
      %p299 = scmp.lt.s32.totalorder %s21, 1
      %s300 = scalar_select %p299, %s21, 1
      %p301 = scmp.lt.s32.totalorder %s23, 0
      %s302 = scalar_select %p301, %s23, 0
      %s303 = sadd.s32 %s302, %s300
      %s304 = smul.addr %s298, 2
      %s305 = sadd.s32 %s303, %s304
      %s306 = smul.addr %s305, 8
      %s307 = scalar_lea.vmem %s2, %s306
      %p308 = scmp.lt.s32.totalorder %s20, 1
      %s309 = scalar_select %p308, %s20, 1
      %p310 = scmp.lt.s32.totalorder %s21, 1
      %s311 = scalar_select %p310, %s21, 1
      %p312 = scmp.lt.s32.totalorder %s22, 0
      %s313 = scalar_select %p312, %s22, 0
      %s314 = sadd.s32 %s313, %s311
      %s315 = smul.addr %s309, 2
      %s316 = sadd.s32 %s314, %s315
      %s317 = smul.addr %s316, 8
      %s318 = scalar_lea.vmem %s3, %s317
      %p319 = scmp.eq.s32.totalorder %s23, 0
      // Predicated region
      $region33: #{gqa_forward.4} parent=31 // pred_check
        %p320 = pneg %p319
      $region34: #{gqa_forward.4} parent=31 // pred_check_branch
        %322 = sbr.rel (%p320) target = $region36
      $region35: #{gqa_forward.4} parent=31 // pred_region
        %vm323 = vcmask 31744
        %324 = vst.msk [vmem:[#allocation2] sm:$0xff] %vm323, -inf
        %325 = vst.msk [vmem:[#allocation3] sm:$0xff] %vm323, 0.0
        %vm326 = vcmask 130048
        %327 = vst.msk [vmem:[#allocation4] sm:$0xff] %vm326, 0.0
      $region36: #{gqa_forward.4} parent=31 // pred_fallthru
        _
      %v328 = vld [vmem:[%s285] sm:$0xff]
      %v329 = vld [vmem:[%s296] sm:$0xff]
      %v330 = vld [vmem:[%s307] sm:$0xff]
      %vm331 = vcmask 31744
      %v333 = vsel %vm331, %v328, 0
      %v336 = vsel %vm331, %v329, 0
      %338 = vmatprep.subr.mxu0 0.0
      %339 = vmatpush1.xpose.msra.mxu0 0.0
      %340 = vmatprep.subr.mxu0 0.0
      %341 = vmatpush1.xpose.msra.mxu0 0.0
      %342 = vmatprep.subr.mxu0 0.0
      %343 = vmatpush1.xpose.msra.mxu0 0.0
      %344 = vmatprep.subr.mxu0 0.0
      %345 = vmatpush1.xpose.msra.mxu0 0.0
      %346 = vmatprep.subr.mxu0 0.0
      %347 = vmatpush1.xpose.msra.mxu0 0.0
      %348 = vmatprep.subr.mxu0 0.0
      %349 = vmatpush1.xpose.msra.mxu0 0.0
      %350 = vmatprep.subr.mxu0 0.0
      %351 = vmatpush1.xpose.msra.mxu0 0.0
      %352 = vmatprep.subr.mxu0 0.0
      %353 = vmatpush1.xpose.msra.mxu0 0.0
      %354 = vmatprep.subr.mxu0 0.0
      %355 = vmatpush1.xpose.msra.mxu0 0.0
      %356 = vmatprep.subr.mxu0 0.0
      %357 = vmatpush1.xpose.msra.mxu0 0.0
      %358 = vmatprep.subr.mxu0 0.0
      %359 = vmatpush1.xpose.msra.mxu0 0.0
      %360 = vmatprep.subr.mxu0 0.0
      %361 = vmatpush1.xpose.msra.mxu0 0.0
      %362 = vmatprep.subr.mxu0 0.0
      %363 = vmatpush1.xpose.msra.mxu0 0.0
      %364 = vmatprep.subr.mxu0 0.0
      %365 = vmatpush1.xpose.msra.mxu0 0.0
      %366 = vmatprep.subr.mxu0 0.0
      %367 = vmatpush1.xpose.msra.mxu0 0.0
      %368 = vmatprep.subr.mxu0 0.0
      %369 = vmatpush1.xpose.msra.mxu0 %v336
      %370 = vmatprep.subr.mxu0 0.0
      %371 = vmatpush2.xpose.msra.mxu0 0.0
      %372 = vmatprep.subr.mxu0 0.0
      %373 = vmatpush2.xpose.msra.mxu0 0.0
      %374 = vmatprep.subr.mxu0 0.0
      %375 = vmatpush2.xpose.msra.mxu0 0.0
      %376 = vmatprep.subr.mxu0 0.0
      %377 = vmatpush2.xpose.msra.mxu0 0.0
      %378 = vmatprep.subr.mxu0 0.0
      %379 = vmatpush2.xpose.msra.mxu0 0.0
      %380 = vmatprep.subr.mxu0 0.0
      %381 = vmatpush2.xpose.msra.mxu0 0.0
      %382 = vmatprep.subr.mxu0 0.0
      %383 = vmatpush2.xpose.msra.mxu0 0.0
      %384 = vmatprep.subr.mxu0 0.0
      %385 = vmatpush2.xpose.msra.mxu0 0.0
      %386 = vmatprep.subr.mxu0 0.0
      %387 = vmatpush2.xpose.msra.mxu0 0.0
      %388 = vmatprep.subr.mxu0 0.0
      %389 = vmatpush2.xpose.msra.mxu0 0.0
      %390 = vmatprep.subr.mxu0 0.0
      %391 = vmatpush2.xpose.msra.mxu0 0.0
      %392 = vmatprep.subr.mxu0 0.0
      %393 = vmatpush2.xpose.msra.mxu0 0.0
      %394 = vmatprep.subr.mxu0 0.0
      %395 = vmatpush2.xpose.msra.mxu0 0.0
      %396 = vmatprep.subr.mxu0 0.0
      %397 = vmatpush2.xpose.msra.mxu0 0.0
      %398 = vmatprep.subr.mxu0 0.0
      %399 = vmatpush2.xpose.msra.mxu0 0.0
      %400 = vmatprep.subr.mxu0 0.0
      %401 = vmatpush2.xpose.msra.mxu0 0.0
      %402 = vmatprep.mubr.f32.mxu0 0.0
      %403 = vmatmul.mubr.f32.gmra.mxu0 %v333
      %v404 = vpop.f32.mrf.mxu0
      %v405 = vadd.f32 0.0, %v404
      %v406 = vpop.f32.mrf.mxu0
      %407 = vdwg.mxu0
      %v408 = vld [vmem:[#allocation2] sm:$0xff]
      %v409 = vld [vmem:[#allocation3] sm:$0xff]
      %vm410 = vcmask 64512
      %v411 = vsel %vm410, %v405, -inf
      %412 = vmax.xlane.f32.xlu0 %v411
      %v413 = vpop.xlane.xlu0 %412
      %v414 = vmax.f32 %v408, %v413
      %v415 = vsub.f32 %v408, %v414
      %v416 = vmul.f32 %v415, 1.442695
      %v417 = vpow.pop %v416
      %419 = vset.pattern.permute.xlu0 0
      %420 = vperm.xlu0 %419, %v414
      %v421 = vpop.permute.xlu0 %420
      %v423 = vsub.f32 %v405, %v421
      %v424 = vmul.f32 %v423, 1.442695
      %v425 = vpow.pop %v424
      %v426 = vmul.f32 %v417, %v409
      %v427 = vsel %vm410, %v425, 0.0
      %428 = vadd.xlane.f32.xlu0 %v427
      %v429 = vpop.xlane.xlu0 %428
      %v430 = vadd.f32 %v426, %v429
      %vm431 = vcmask 7168
      %432 = vst.msk [vmem:[#allocation3] sm:$0xff] %vm431, %v430
      %v433 = vld [vmem:[#allocation4] sm:$0xff]
      %435 = vset.pattern.permute.xlu0 0
      %436 = vperm.xlu0 %435, %v417
      %v437 = vpop.permute.xlu0 %436
      %v439 = vmul.f32 %v437, %v433
      %v441 = vsel %vm410, %v425, 0
      %443 = vmatprep.subr.mxu0 0.0
      %444 = vmatpush1.msra.mxu0 0.0
      %445 = vmatprep.subr.mxu0 0.0
      %446 = vmatpush1.msra.mxu0 0.0
      %447 = vmatprep.subr.mxu0 0.0
      %448 = vmatpush1.msra.mxu0 0.0
      %449 = vmatprep.subr.mxu0 0.0
      %450 = vmatpush1.msra.mxu0 0.0
      %451 = vmatprep.subr.mxu0 0.0
      %452 = vmatpush1.msra.mxu0 0.0
      %453 = vmatprep.subr.mxu0 0.0
      %454 = vmatpush1.msra.mxu0 0.0
      %455 = vmatprep.subr.mxu0 0.0
      %456 = vmatpush1.msra.mxu0 0.0
      %457 = vmatprep.subr.mxu0 0.0
      %458 = vmatpush1.msra.mxu0 0.0
      %459 = vmatprep.subr.mxu0 0.0
      %460 = vmatpush1.msra.mxu0 0.0
      %461 = vmatprep.subr.mxu0 0.0
      %462 = vmatpush1.msra.mxu0 0.0
      %463 = vmatprep.subr.mxu0 0.0
      %464 = vmatpush1.msra.mxu0 0.0
      %465 = vmatprep.subr.mxu0 0.0
      %466 = vmatpush1.msra.mxu0 0.0
      %467 = vmatprep.subr.mxu0 0.0
      %468 = vmatpush1.msra.mxu0 0.0
      %469 = vmatprep.subr.mxu0 0.0
      %470 = vmatpush1.msra.mxu0 0.0
      %471 = vmatprep.subr.mxu0 0.0
      %472 = vmatpush1.msra.mxu0 0.0
      %473 = vmatprep.subr.mxu0 0.0
      %474 = vmatpush1.msra.mxu0 %v330
      %475 = vmatprep.subr.mxu0 0.0
      %476 = vmatpush2.msra.mxu0 0.0
      %477 = vmatprep.subr.mxu0 0.0
      %478 = vmatpush2.msra.mxu0 0.0
      %479 = vmatprep.subr.mxu0 0.0
      %480 = vmatpush2.msra.mxu0 0.0
      %481 = vmatprep.subr.mxu0 0.0
      %482 = vmatpush2.msra.mxu0 0.0
      %483 = vmatprep.subr.mxu0 0.0
      %484 = vmatpush2.msra.mxu0 0.0
      %485 = vmatprep.subr.mxu0 0.0
      %486 = vmatpush2.msra.mxu0 0.0
      %487 = vmatprep.subr.mxu0 0.0
      %488 = vmatpush2.msra.mxu0 0.0
      %489 = vmatprep.subr.mxu0 0.0
      %490 = vmatpush2.msra.mxu0 0.0
      %491 = vmatprep.subr.mxu0 0.0
      %492 = vmatpush2.msra.mxu0 0.0
      %493 = vmatprep.subr.mxu0 0.0
      %494 = vmatpush2.msra.mxu0 0.0
      %495 = vmatprep.subr.mxu0 0.0
      %496 = vmatpush2.msra.mxu0 0.0
      %497 = vmatprep.subr.mxu0 0.0
      %498 = vmatpush2.msra.mxu0 0.0
      %499 = vmatprep.subr.mxu0 0.0
      %500 = vmatpush2.msra.mxu0 0.0
      %501 = vmatprep.subr.mxu0 0.0
      %502 = vmatpush2.msra.mxu0 0.0
      %503 = vmatprep.subr.mxu0 0.0
      %504 = vmatpush2.msra.mxu0 0.0
      %505 = vmatprep.subr.mxu0 0.0
      %506 = vmatpush2.msra.mxu0 0.0
      %507 = vmatprep.mubr.f32.mxu0 0.0
      %508 = vmatmul.mubr.f32.gmra.mxu0 %v441
      %v509 = vpop.f32.mrf.mxu0
      %v510 = vadd.f32 0.0, %v509
      %v511 = vpop.f32.mrf.mxu0
      %512 = vdwg.mxu0
      %v513 = vadd.f32 %v439, %v510
      %514 = vst.msk [vmem:[#allocation4] sm:$0xff] %vm331, %v513
      %515 = vst.msk [vmem:[#allocation2] sm:$0xff] %vm431, %v414
      %516 = vrot.lane.b32.xlu0 %v328, 124
      %v517 = vpop.permute.xlu0 %516
      %v518 = vsel %vm331, %v517, 0
      %520 = vmatprep.subr.mxu0 0.0
      %521 = vmatpush1.xpose.msra.mxu0 0.0
      %522 = vmatprep.subr.mxu0 0.0
      %523 = vmatpush1.xpose.msra.mxu0 0.0
      %524 = vmatprep.subr.mxu0 0.0
      %525 = vmatpush1.xpose.msra.mxu0 0.0
      %526 = vmatprep.subr.mxu0 0.0
      %527 = vmatpush1.xpose.msra.mxu0 0.0
      %528 = vmatprep.subr.mxu0 0.0
      %529 = vmatpush1.xpose.msra.mxu0 0.0
      %530 = vmatprep.subr.mxu0 0.0
      %531 = vmatpush1.xpose.msra.mxu0 0.0
      %532 = vmatprep.subr.mxu0 0.0
      %533 = vmatpush1.xpose.msra.mxu0 0.0
      %534 = vmatprep.subr.mxu0 0.0
      %535 = vmatpush1.xpose.msra.mxu0 0.0
      %536 = vmatprep.subr.mxu0 0.0
      %537 = vmatpush1.xpose.msra.mxu0 0.0
      %538 = vmatprep.subr.mxu0 0.0
      %539 = vmatpush1.xpose.msra.mxu0 0.0
      %540 = vmatprep.subr.mxu0 0.0
      %541 = vmatpush1.xpose.msra.mxu0 0.0
      %542 = vmatprep.subr.mxu0 0.0
      %543 = vmatpush1.xpose.msra.mxu0 0.0
      %544 = vmatprep.subr.mxu0 0.0
      %545 = vmatpush1.xpose.msra.mxu0 0.0
      %546 = vmatprep.subr.mxu0 0.0
      %547 = vmatpush1.xpose.msra.mxu0 0.0
      %548 = vmatprep.subr.mxu0 0.0
      %549 = vmatpush1.xpose.msra.mxu0 0.0
      %550 = vmatprep.subr.mxu0 0.0
      %551 = vmatpush1.xpose.msra.mxu0 %v336
      %552 = vmatprep.subr.mxu0 0.0
      %553 = vmatpush2.xpose.msra.mxu0 0.0
      %554 = vmatprep.subr.mxu0 0.0
      %555 = vmatpush2.xpose.msra.mxu0 0.0
      %556 = vmatprep.subr.mxu0 0.0
      %557 = vmatpush2.xpose.msra.mxu0 0.0
      %558 = vmatprep.subr.mxu0 0.0
      %559 = vmatpush2.xpose.msra.mxu0 0.0
      %560 = vmatprep.subr.mxu0 0.0
      %561 = vmatpush2.xpose.msra.mxu0 0.0
      %562 = vmatprep.subr.mxu0 0.0
      %563 = vmatpush2.xpose.msra.mxu0 0.0
      %564 = vmatprep.subr.mxu0 0.0
      %565 = vmatpush2.xpose.msra.mxu0 0.0
      %566 = vmatprep.subr.mxu0 0.0
      %567 = vmatpush2.xpose.msra.mxu0 0.0
      %568 = vmatprep.subr.mxu0 0.0
      %569 = vmatpush2.xpose.msra.mxu0 0.0
      %570 = vmatprep.subr.mxu0 0.0
      %571 = vmatpush2.xpose.msra.mxu0 0.0
      %572 = vmatprep.subr.mxu0 0.0
      %573 = vmatpush2.xpose.msra.mxu0 0.0
      %574 = vmatprep.subr.mxu0 0.0
      %575 = vmatpush2.xpose.msra.mxu0 0.0
      %576 = vmatprep.subr.mxu0 0.0
      %577 = vmatpush2.xpose.msra.mxu0 0.0
      %578 = vmatprep.subr.mxu0 0.0
      %579 = vmatpush2.xpose.msra.mxu0 0.0
      %580 = vmatprep.subr.mxu0 0.0
      %581 = vmatpush2.xpose.msra.mxu0 0.0
      %582 = vmatprep.subr.mxu0 0.0
      %583 = vmatpush2.xpose.msra.mxu0 0.0
      %584 = vmatprep.mubr.f32.mxu0 0.0
      %585 = vmatmul.mubr.f32.gmra.mxu0 %v518
      %v586 = vpop.f32.mrf.mxu0
      %v587 = vadd.f32 0.0, %v586
      %v588 = vpop.f32.mrf.mxu0
      %589 = vdwg.mxu0
      %v590 = vld [vmem:[#allocation2] sm:$0xff]
      %v591 = vld [vmem:[#allocation3] sm:$0xff]
      %v592 = vsel %vm410, %v587, -inf
      %593 = vmax.xlane.f32.xlu0 %v592
      %v594 = vpop.xlane.xlu0 %593
      %v595 = vmax.f32 %v590, %v594
      %v596 = vsub.f32 %v590, %v595
      %v597 = vmul.f32 %v596, 1.442695
      %v598 = vpow.pop %v597
      %600 = vset.pattern.permute.xlu0 1
      %601 = vperm.xlu0 %600, %v595
      %v602 = vpop.permute.xlu0 %601
      %v604 = vsub.f32 %v587, %v602
      %v605 = vmul.f32 %v604, 1.442695
      %v606 = vpow.pop %v605
      %v607 = vmul.f32 %v598, %v591
      %v608 = vsel %vm410, %v606, 0.0
      %609 = vadd.xlane.f32.xlu0 %v608
      %v610 = vpop.xlane.xlu0 %609
      %v611 = vadd.f32 %v607, %v610
      %vm612 = vcmask 15368
      %613 = vst.msk [vmem:[#allocation3] sm:$0xff] %vm612, %v611
      %v614 = vld [vmem:[#allocation4] sm:$0xff]
      %616 = vset.pattern.permute.xlu0 1
      %617 = vperm.xlu0 %616, %v598
      %v618 = vpop.permute.xlu0 %617
      %v620 = vmul.f32 %v618, %v614
      %v622 = vsel %vm410, %v606, 0
      %624 = vmatprep.subr.mxu0 0.0
      %625 = vmatpush1.msra.mxu0 0.0
      %626 = vmatprep.subr.mxu0 0.0
      %627 = vmatpush1.msra.mxu0 0.0
      %628 = vmatprep.subr.mxu0 0.0
      %629 = vmatpush1.msra.mxu0 0.0
      %630 = vmatprep.subr.mxu0 0.0
      %631 = vmatpush1.msra.mxu0 0.0
      %632 = vmatprep.subr.mxu0 0.0
      %633 = vmatpush1.msra.mxu0 0.0
      %634 = vmatprep.subr.mxu0 0.0
      %635 = vmatpush1.msra.mxu0 0.0
      %636 = vmatprep.subr.mxu0 0.0
      %637 = vmatpush1.msra.mxu0 0.0
      %638 = vmatprep.subr.mxu0 0.0
      %639 = vmatpush1.msra.mxu0 0.0
      %640 = vmatprep.subr.mxu0 0.0
      %641 = vmatpush1.msra.mxu0 0.0
      %642 = vmatprep.subr.mxu0 0.0
      %643 = vmatpush1.msra.mxu0 0.0
      %644 = vmatprep.subr.mxu0 0.0
      %645 = vmatpush1.msra.mxu0 0.0
      %646 = vmatprep.subr.mxu0 0.0
      %647 = vmatpush1.msra.mxu0 0.0
      %648 = vmatprep.subr.mxu0 0.0
      %649 = vmatpush1.msra.mxu0 0.0
      %650 = vmatprep.subr.mxu0 0.0
      %651 = vmatpush1.msra.mxu0 0.0
      %652 = vmatprep.subr.mxu0 0.0
      %653 = vmatpush1.msra.mxu0 0.0
      %654 = vmatprep.subr.mxu0 0.0
      %655 = vmatpush1.msra.mxu0 %v330
      %656 = vmatprep.subr.mxu0 0.0
      %657 = vmatpush2.msra.mxu0 0.0
      %658 = vmatprep.subr.mxu0 0.0
      %659 = vmatpush2.msra.mxu0 0.0
      %660 = vmatprep.subr.mxu0 0.0
      %661 = vmatpush2.msra.mxu0 0.0
      %662 = vmatprep.subr.mxu0 0.0
      %663 = vmatpush2.msra.mxu0 0.0
      %664 = vmatprep.subr.mxu0 0.0
      %665 = vmatpush2.msra.mxu0 0.0
      %666 = vmatprep.subr.mxu0 0.0
      %667 = vmatpush2.msra.mxu0 0.0
      %668 = vmatprep.subr.mxu0 0.0
      %669 = vmatpush2.msra.mxu0 0.0
      %670 = vmatprep.subr.mxu0 0.0
      %671 = vmatpush2.msra.mxu0 0.0
      %672 = vmatprep.subr.mxu0 0.0
      %673 = vmatpush2.msra.mxu0 0.0
      %674 = vmatprep.subr.mxu0 0.0
      %675 = vmatpush2.msra.mxu0 0.0
      %676 = vmatprep.subr.mxu0 0.0
      %677 = vmatpush2.msra.mxu0 0.0
      %678 = vmatprep.subr.mxu0 0.0
      %679 = vmatpush2.msra.mxu0 0.0
      %680 = vmatprep.subr.mxu0 0.0
      %681 = vmatpush2.msra.mxu0 0.0
      %682 = vmatprep.subr.mxu0 0.0
      %683 = vmatpush2.msra.mxu0 0.0
      %684 = vmatprep.subr.mxu0 0.0
      %685 = vmatpush2.msra.mxu0 0.0
      %686 = vmatprep.subr.mxu0 0.0
      %687 = vmatpush2.msra.mxu0 0.0
      %688 = vmatprep.mubr.f32.mxu0 0.0
      %689 = vmatmul.mubr.f32.gmra.mxu0 %v622
      %v690 = vpop.f32.mrf.mxu0
      %v691 = vadd.f32 0.0, %v690
      %v692 = vpop.f32.mrf.mxu0
      %693 = vdwg.mxu0
      %695 = vrot.lane.b32.xlu0 %v691, 4
      %v696 = vpop.permute.xlu0 %695
      %v698 = vadd.f32 %v620, %v696
      %vm699 = vcmask 64544
      %700 = vst.msk [vmem:[#allocation4] sm:$0xff] %vm699, %v698
      %701 = vst.msk [vmem:[#allocation2] sm:$0xff] %vm612, %v595
      %702 = vrot.lane.b32.xlu0 %v328, 120
      %v703 = vpop.permute.xlu0 %702
      %v704 = vsel %vm331, %v703, 0
      %706 = vmatprep.subr.mxu0 0.0
      %707 = vmatpush1.xpose.msra.mxu0 0.0
      %708 = vmatprep.subr.mxu0 0.0
      %709 = vmatpush1.xpose.msra.mxu0 0.0
      %710 = vmatprep.subr.mxu0 0.0
      %711 = vmatpush1.xpose.msra.mxu0 0.0
      %712 = vmatprep.subr.mxu0 0.0
      %713 = vmatpush1.xpose.msra.mxu0 0.0
      %714 = vmatprep.subr.mxu0 0.0
      %715 = vmatpush1.xpose.msra.mxu0 0.0
      %716 = vmatprep.subr.mxu0 0.0
      %717 = vmatpush1.xpose.msra.mxu0 0.0
      %718 = vmatprep.subr.mxu0 0.0
      %719 = vmatpush1.xpose.msra.mxu0 0.0
      %720 = vmatprep.subr.mxu0 0.0
      %721 = vmatpush1.xpose.msra.mxu0 0.0
      %722 = vmatprep.subr.mxu0 0.0
      %723 = vmatpush1.xpose.msra.mxu0 0.0
      %724 = vmatprep.subr.mxu0 0.0
      %725 = vmatpush1.xpose.msra.mxu0 0.0
      %726 = vmatprep.subr.mxu0 0.0
      %727 = vmatpush1.xpose.msra.mxu0 0.0
      %728 = vmatprep.subr.mxu0 0.0
      %729 = vmatpush1.xpose.msra.mxu0 0.0
      %730 = vmatprep.subr.mxu0 0.0
      %731 = vmatpush1.xpose.msra.mxu0 0.0
      %732 = vmatprep.subr.mxu0 0.0
      %733 = vmatpush1.xpose.msra.mxu0 0.0
      %734 = vmatprep.subr.mxu0 0.0
      %735 = vmatpush1.xpose.msra.mxu0 0.0
      %736 = vmatprep.subr.mxu0 0.0
      %737 = vmatpush1.xpose.msra.mxu0 %v336
      %738 = vmatprep.subr.mxu0 0.0
      %739 = vmatpush2.xpose.msra.mxu0 0.0
      %740 = vmatprep.subr.mxu0 0.0
      %741 = vmatpush2.xpose.msra.mxu0 0.0
      %742 = vmatprep.subr.mxu0 0.0
      %743 = vmatpush2.xpose.msra.mxu0 0.0
      %744 = vmatprep.subr.mxu0 0.0
      %745 = vmatpush2.xpose.msra.mxu0 0.0
      %746 = vmatprep.subr.mxu0 0.0
      %747 = vmatpush2.xpose.msra.mxu0 0.0
      %748 = vmatprep.subr.mxu0 0.0
      %749 = vmatpush2.xpose.msra.mxu0 0.0
      %750 = vmatprep.subr.mxu0 0.0
      %751 = vmatpush2.xpose.msra.mxu0 0.0
      %752 = vmatprep.subr.mxu0 0.0
      %753 = vmatpush2.xpose.msra.mxu0 0.0
      %754 = vmatprep.subr.mxu0 0.0
      %755 = vmatpush2.xpose.msra.mxu0 0.0
      %756 = vmatprep.subr.mxu0 0.0
      %757 = vmatpush2.xpose.msra.mxu0 0.0
      %758 = vmatprep.subr.mxu0 0.0
      %759 = vmatpush2.xpose.msra.mxu0 0.0
      %760 = vmatprep.subr.mxu0 0.0
      %761 = vmatpush2.xpose.msra.mxu0 0.0
      %762 = vmatprep.subr.mxu0 0.0
      %763 = vmatpush2.xpose.msra.mxu0 0.0
      %764 = vmatprep.subr.mxu0 0.0
      %765 = vmatpush2.xpose.msra.mxu0 0.0
      %766 = vmatprep.subr.mxu0 0.0
      %767 = vmatpush2.xpose.msra.mxu0 0.0
      %768 = vmatprep.subr.mxu0 0.0
      %769 = vmatpush2.xpose.msra.mxu0 0.0
      %770 = vmatprep.mubr.f32.mxu0 0.0
      %771 = vmatmul.mubr.f32.gmra.mxu0 %v704
      %v772 = vpop.f32.mrf.mxu0
      %v773 = vadd.f32 0.0, %v772
      %v774 = vpop.f32.mrf.mxu0
      %775 = vdwg.mxu0
      %v776 = vld [vmem:[#allocation2] sm:$0xff]
      %v777 = vld [vmem:[#allocation3] sm:$0xff]
      %v778 = vsel %vm410, %v773, -inf
      %779 = vmax.xlane.f32.xlu0 %v778
      %v780 = vpop.xlane.xlu0 %779
      %v781 = vmax.f32 %v776, %v780
      %v782 = vsub.f32 %v776, %v781
      %v783 = vmul.f32 %v782, 1.442695
      %v784 = vpow.pop %v783
      %786 = vset.pattern.permute.xlu0 2
      %787 = vperm.xlu0 %786, %v781
      %v788 = vpop.permute.xlu0 %787
      %v790 = vsub.f32 %v773, %v788
      %v791 = vmul.f32 %v790, 1.442695
      %v792 = vpow.pop %v791
      %v793 = vmul.f32 %v784, %v777
      %v794 = vsel %vm410, %v792, 0.0
      %795 = vadd.xlane.f32.xlu0 %v794
      %v796 = vpop.xlane.xlu0 %795
      %v797 = vadd.f32 %v793, %v796
      %vm798 = vcmask 23568
      %799 = vst.msk [vmem:[#allocation3] sm:$0xff] %vm798, %v797
      %v800 = vld [vmem:[#allocation4] sm:$0xff]
      %802 = vset.pattern.permute.xlu0 2
      %803 = vperm.xlu0 %802, %v784
      %v804 = vpop.permute.xlu0 %803
      %v806 = vmul.f32 %v804, %v800
      %v808 = vsel %vm410, %v792, 0
      %810 = vmatprep.subr.mxu0 0.0
      %811 = vmatpush1.msra.mxu0 0.0
      %812 = vmatprep.subr.mxu0 0.0
      %813 = vmatpush1.msra.mxu0 0.0
      %814 = vmatprep.subr.mxu0 0.0
      %815 = vmatpush1.msra.mxu0 0.0
      %816 = vmatprep.subr.mxu0 0.0
      %817 = vmatpush1.msra.mxu0 0.0
      %818 = vmatprep.subr.mxu0 0.0
      %819 = vmatpush1.msra.mxu0 0.0
      %820 = vmatprep.subr.mxu0 0.0
      %821 = vmatpush1.msra.mxu0 0.0
      %822 = vmatprep.subr.mxu0 0.0
      %823 = vmatpush1.msra.mxu0 0.0
      %824 = vmatprep.subr.mxu0 0.0
      %825 = vmatpush1.msra.mxu0 0.0
      %826 = vmatprep.subr.mxu0 0.0
      %827 = vmatpush1.msra.mxu0 0.0
      %828 = vmatprep.subr.mxu0 0.0
      %829 = vmatpush1.msra.mxu0 0.0
      %830 = vmatprep.subr.mxu0 0.0
      %831 = vmatpush1.msra.mxu0 0.0
      %832 = vmatprep.subr.mxu0 0.0
      %833 = vmatpush1.msra.mxu0 0.0
      %834 = vmatprep.subr.mxu0 0.0
      %835 = vmatpush1.msra.mxu0 0.0
      %836 = vmatprep.subr.mxu0 0.0
      %837 = vmatpush1.msra.mxu0 0.0
      %838 = vmatprep.subr.mxu0 0.0
      %839 = vmatpush1.msra.mxu0 0.0
      %840 = vmatprep.subr.mxu0 0.0
      %841 = vmatpush1.msra.mxu0 %v330
      %842 = vmatprep.subr.mxu0 0.0
      %843 = vmatpush2.msra.mxu0 0.0
      %844 = vmatprep.subr.mxu0 0.0
      %845 = vmatpush2.msra.mxu0 0.0
      %846 = vmatprep.subr.mxu0 0.0
      %847 = vmatpush2.msra.mxu0 0.0
      %848 = vmatprep.subr.mxu0 0.0
      %849 = vmatpush2.msra.mxu0 0.0
      %850 = vmatprep.subr.mxu0 0.0
      %851 = vmatpush2.msra.mxu0 0.0
      %852 = vmatprep.subr.mxu0 0.0
      %853 = vmatpush2.msra.mxu0 0.0
      %854 = vmatprep.subr.mxu0 0.0
      %855 = vmatpush2.msra.mxu0 0.0
      %856 = vmatprep.subr.mxu0 0.0
      %857 = vmatpush2.msra.mxu0 0.0
      %858 = vmatprep.subr.mxu0 0.0
      %859 = vmatpush2.msra.mxu0 0.0
      %860 = vmatprep.subr.mxu0 0.0
      %861 = vmatpush2.msra.mxu0 0.0
      %862 = vmatprep.subr.mxu0 0.0
      %863 = vmatpush2.msra.mxu0 0.0
      %864 = vmatprep.subr.mxu0 0.0
      %865 = vmatpush2.msra.mxu0 0.0
      %866 = vmatprep.subr.mxu0 0.0
      %867 = vmatpush2.msra.mxu0 0.0
      %868 = vmatprep.subr.mxu0 0.0
      %869 = vmatpush2.msra.mxu0 0.0
      %870 = vmatprep.subr.mxu0 0.0
      %871 = vmatpush2.msra.mxu0 0.0
      %872 = vmatprep.subr.mxu0 0.0
      %873 = vmatpush2.msra.mxu0 0.0
      %874 = vmatprep.mubr.f32.mxu0 0.0
      %875 = vmatmul.mubr.f32.gmra.mxu0 %v808
      %v876 = vpop.f32.mrf.mxu0
      %v877 = vadd.f32 0.0, %v876
      %v878 = vpop.f32.mrf.mxu0
      %879 = vdwg.mxu0
      %881 = vrot.lane.b32.xlu0 %v877, 8
      %v882 = vpop.permute.xlu0 %881
      %v884 = vadd.f32 %v806, %v882
      %vm885 = vcmask 97344
      %886 = vst.msk [vmem:[#allocation4] sm:$0xff] %vm885, %v884
      %887 = vst.msk [vmem:[#allocation2] sm:$0xff] %vm798, %v781
      %888 = vrot.lane.b32.xlu0 %v328, 116
      %v889 = vpop.permute.xlu0 %888
      %v890 = vsel %vm331, %v889, 0
      %892 = vmatprep.subr.mxu0 0.0
      %893 = vmatpush1.xpose.msra.mxu0 0.0
      %894 = vmatprep.subr.mxu0 0.0
      %895 = vmatpush1.xpose.msra.mxu0 0.0
      %896 = vmatprep.subr.mxu0 0.0
      %897 = vmatpush1.xpose.msra.mxu0 0.0
      %898 = vmatprep.subr.mxu0 0.0
      %899 = vmatpush1.xpose.msra.mxu0 0.0
      %900 = vmatprep.subr.mxu0 0.0
      %901 = vmatpush1.xpose.msra.mxu0 0.0
      %902 = vmatprep.subr.mxu0 0.0
      %903 = vmatpush1.xpose.msra.mxu0 0.0
      %904 = vmatprep.subr.mxu0 0.0
      %905 = vmatpush1.xpose.msra.mxu0 0.0
      %906 = vmatprep.subr.mxu0 0.0
      %907 = vmatpush1.xpose.msra.mxu0 0.0
      %908 = vmatprep.subr.mxu0 0.0
      %909 = vmatpush1.xpose.msra.mxu0 0.0
      %910 = vmatprep.subr.mxu0 0.0
      %911 = vmatpush1.xpose.msra.mxu0 0.0
      %912 = vmatprep.subr.mxu0 0.0
      %913 = vmatpush1.xpose.msra.mxu0 0.0
      %914 = vmatprep.subr.mxu0 0.0
      %915 = vmatpush1.xpose.msra.mxu0 0.0
      %916 = vmatprep.subr.mxu0 0.0
      %917 = vmatpush1.xpose.msra.mxu0 0.0
      %918 = vmatprep.subr.mxu0 0.0
      %919 = vmatpush1.xpose.msra.mxu0 0.0
      %920 = vmatprep.subr.mxu0 0.0
      %921 = vmatpush1.xpose.msra.mxu0 0.0
      %922 = vmatprep.subr.mxu0 0.0
      %923 = vmatpush1.xpose.msra.mxu0 %v336
      %924 = vmatprep.subr.mxu0 0.0
      %925 = vmatpush2.xpose.msra.mxu0 0.0
      %926 = vmatprep.subr.mxu0 0.0
      %927 = vmatpush2.xpose.msra.mxu0 0.0
      %928 = vmatprep.subr.mxu0 0.0
      %929 = vmatpush2.xpose.msra.mxu0 0.0
      %930 = vmatprep.subr.mxu0 0.0
      %931 = vmatpush2.xpose.msra.mxu0 0.0
      %932 = vmatprep.subr.mxu0 0.0
      %933 = vmatpush2.xpose.msra.mxu0 0.0
      %934 = vmatprep.subr.mxu0 0.0
      %935 = vmatpush2.xpose.msra.mxu0 0.0
      %936 = vmatprep.subr.mxu0 0.0
      %937 = vmatpush2.xpose.msra.mxu0 0.0
      %938 = vmatprep.subr.mxu0 0.0
      %939 = vmatpush2.xpose.msra.mxu0 0.0
      %940 = vmatprep.subr.mxu0 0.0
      %941 = vmatpush2.xpose.msra.mxu0 0.0
      %942 = vmatprep.subr.mxu0 0.0
      %943 = vmatpush2.xpose.msra.mxu0 0.0
      %944 = vmatprep.subr.mxu0 0.0
      %945 = vmatpush2.xpose.msra.mxu0 0.0
      %946 = vmatprep.subr.mxu0 0.0
      %947 = vmatpush2.xpose.msra.mxu0 0.0
      %948 = vmatprep.subr.mxu0 0.0
      %949 = vmatpush2.xpose.msra.mxu0 0.0
      %950 = vmatprep.subr.mxu0 0.0
      %951 = vmatpush2.xpose.msra.mxu0 0.0
      %952 = vmatprep.subr.mxu0 0.0
      %953 = vmatpush2.xpose.msra.mxu0 0.0
      %954 = vmatprep.subr.mxu0 0.0
      %955 = vmatpush2.xpose.msra.mxu0 0.0
      %956 = vmatprep.mubr.f32.mxu0 0.0
      %957 = vmatmul.mubr.f32.gmra.mxu0 %v890
      %v958 = vpop.f32.mrf.mxu0
      %v959 = vadd.f32 0.0, %v958
      %v960 = vpop.f32.mrf.mxu0
      %961 = vdwg.mxu0
      %v962 = vld [vmem:[#allocation2] sm:$0xff]
      %v963 = vld [vmem:[#allocation3] sm:$0xff]
      %v964 = vsel %vm410, %v959, -inf
      %965 = vmax.xlane.f32.xlu0 %v964
      %v966 = vpop.xlane.xlu0 %965
      %v967 = vmax.f32 %v962, %v966
      %v968 = vsub.f32 %v962, %v967
      %v969 = vmul.f32 %v968, 1.442695
      %v970 = vpow.pop %v969
      %972 = vset.pattern.permute.xlu0 3
      %973 = vperm.xlu0 %972, %v967
      %v974 = vpop.permute.xlu0 %973
      %v976 = vsub.f32 %v959, %v974
      %v977 = vmul.f32 %v976, 1.442695
      %v978 = vpow.pop %v977
      %v979 = vmul.f32 %v970, %v963
      %v980 = vsel %vm410, %v978, 0.0
      %981 = vadd.xlane.f32.xlu0 %v980
      %v982 = vpop.xlane.xlu0 %981
      %v983 = vadd.f32 %v979, %v982
      %vm984 = vcmask 31768
      %985 = vst.msk [vmem:[#allocation3] sm:$0xff] %vm984, %v983
      %v986 = vld [vmem:[#allocation4] sm:$0xff]
      %988 = vset.pattern.permute.xlu0 3
      %989 = vperm.xlu0 %988, %v970
      %v990 = vpop.permute.xlu0 %989
      %v992 = vmul.f32 %v990, %v986
      %v994 = vsel %vm410, %v978, 0
      %996 = vmatprep.subr.mxu0 0.0
      %997 = vmatpush1.msra.mxu0 0.0
      %998 = vmatprep.subr.mxu0 0.0
      %999 = vmatpush1.msra.mxu0 0.0
      %1000 = vmatprep.subr.mxu0 0.0
      %1001 = vmatpush1.msra.mxu0 0.0
      %1002 = vmatprep.subr.mxu0 0.0
      %1003 = vmatpush1.msra.mxu0 0.0
      %1004 = vmatprep.subr.mxu0 0.0
      %1005 = vmatpush1.msra.mxu0 0.0
      %1006 = vmatprep.subr.mxu0 0.0
      %1007 = vmatpush1.msra.mxu0 0.0
      %1008 = vmatprep.subr.mxu0 0.0
      %1009 = vmatpush1.msra.mxu0 0.0
      %1010 = vmatprep.subr.mxu0 0.0
      %1011 = vmatpush1.msra.mxu0 0.0
      %1012 = vmatprep.subr.mxu0 0.0
      %1013 = vmatpush1.msra.mxu0 0.0
      %1014 = vmatprep.subr.mxu0 0.0
      %1015 = vmatpush1.msra.mxu0 0.0
      %1016 = vmatprep.subr.mxu0 0.0
      %1017 = vmatpush1.msra.mxu0 0.0
      %1018 = vmatprep.subr.mxu0 0.0
      %1019 = vmatpush1.msra.mxu0 0.0
      %1020 = vmatprep.subr.mxu0 0.0
      %1021 = vmatpush1.msra.mxu0 0.0
      %1022 = vmatprep.subr.mxu0 0.0
      %1023 = vmatpush1.msra.mxu0 0.0
      %1024 = vmatprep.subr.mxu0 0.0
      %1025 = vmatpush1.msra.mxu0 0.0
      %1026 = vmatprep.subr.mxu0 0.0
      %1027 = vmatpush1.msra.mxu0 %v330
      %1028 = vmatprep.subr.mxu0 0.0
      %1029 = vmatpush2.msra.mxu0 0.0
      %1030 = vmatprep.subr.mxu0 0.0
      %1031 = vmatpush2.msra.mxu0 0.0
      %1032 = vmatprep.subr.mxu0 0.0
      %1033 = vmatpush2.msra.mxu0 0.0
      %1034 = vmatprep.subr.mxu0 0.0
      %1035 = vmatpush2.msra.mxu0 0.0
      %1036 = vmatprep.subr.mxu0 0.0
      %1037 = vmatpush2.msra.mxu0 0.0
      %1038 = vmatprep.subr.mxu0 0.0
      %1039 = vmatpush2.msra.mxu0 0.0
      %1040 = vmatprep.subr.mxu0 0.0
      %1041 = vmatpush2.msra.mxu0 0.0
      %1042 = vmatprep.subr.mxu0 0.0
      %1043 = vmatpush2.msra.mxu0 0.0
      %1044 = vmatprep.subr.mxu0 0.0
      %1045 = vmatpush2.msra.mxu0 0.0
      %1046 = vmatprep.subr.mxu0 0.0
      %1047 = vmatpush2.msra.mxu0 0.0
      %1048 = vmatprep.subr.mxu0 0.0
      %1049 = vmatpush2.msra.mxu0 0.0
      %1050 = vmatprep.subr.mxu0 0.0
      %1051 = vmatpush2.msra.mxu0 0.0
      %1052 = vmatprep.subr.mxu0 0.0
      %1053 = vmatpush2.msra.mxu0 0.0
      %1054 = vmatprep.subr.mxu0 0.0
      %1055 = vmatpush2.msra.mxu0 0.0
      %1056 = vmatprep.subr.mxu0 0.0
      %1057 = vmatpush2.msra.mxu0 0.0
      %1058 = vmatprep.subr.mxu0 0.0
      %1059 = vmatpush2.msra.mxu0 0.0
      %1060 = vmatprep.mubr.f32.mxu0 0.0
      %1061 = vmatmul.mubr.f32.gmra.mxu0 %v994
      %v1062 = vpop.f32.mrf.mxu0
      %v1063 = vadd.f32 0.0, %v1062
      %v1064 = vpop.f32.mrf.mxu0
      %1065 = vdwg.mxu0
      %1067 = vrot.lane.b32.xlu0 %v1063, 12
      %v1068 = vpop.permute.xlu0 %1067
      %v1070 = vadd.f32 %v992, %v1068
      %vm1071 = vcmask 130144
      %1072 = vst.msk [vmem:[#allocation4] sm:$0xff] %vm1071, %v1070
      %1073 = vst.msk [vmem:[#allocation2] sm:$0xff] %vm984, %v967
      // Predicated region
      $region37: #{gqa_forward.4} parent=31 // pred_check
        %p1074 = pneg %p319
      $region38: #{gqa_forward.4} parent=31 // pred_check_branch
        %1076 = sbr.rel (%p1074) target = $region40
      $region39: #{gqa_forward.4} parent=31 // pred_region
        %v1077 = vld [vmem:[#allocation3] sm:$0xff]
        %v1078 = vrcp.pop %v1077
        %v1079 = vld [vmem:[#allocation4] sm:$0xff]
        %1081 = vset.pattern.permute.xlu0 0
        %1082 = vperm.xlu0 %1081, %v1078
        %v1083 = vpop.permute.xlu0 %1082
        %v1085 = vmul.f32 %v1079, %v1083
        %1086 = vst.msk [vmem:[%s318] sm:$0xff] %vm331, %v1085
        %v1087 = vld [vmem:[#allocation4] sm:$0xff]
        %1088 = vset.pattern.permute.xlu0 1
        %1089 = vperm.xlu0 %1088, %v1078
        %v1090 = vpop.permute.xlu0 %1089
        %v1092 = vmul.f32 %v1087, %v1090
        %1093 = vst.msk [vmem:[%s318] sm:$0xff] %vm699, %v1092
        %v1094 = vld [vmem:[#allocation4] sm:$0xff]
        %1095 = vset.pattern.permute.xlu0 2
        %1096 = vperm.xlu0 %1095, %v1078
        %v1097 = vpop.permute.xlu0 %1096
        %v1099 = vmul.f32 %v1094, %v1097
        %1100 = vst.msk [vmem:[%s318] sm:$0xff] %vm885, %v1099
        %v1101 = vld [vmem:[#allocation4] sm:$0xff]
        %1102 = vset.pattern.permute.xlu0 3
        %1103 = vperm.xlu0 %1102, %v1078
        %v1104 = vpop.permute.xlu0 %1103
        %v1106 = vmul.f32 %v1101, %v1104
        %1107 = vst.msk [vmem:[%s318] sm:$0xff] %vm1071, %v1106
      $region40: #{gqa_forward.4} parent=31 // pred_fallthru
        _
      %p1108 = scmp.lt.s32.totalorder %s20, 1
      %s1109 = scalar_select %p1108, %s20, 1
      %p1110 = scmp.lt.s32.totalorder %s21, 1
      %s1111 = scalar_select %p1110, %s21, 1
      %p1112 = scmp.lt.s32.totalorder %s22, 0
      %s1113 = scalar_select %p1112, %s22, 0
      %s1114 = sadd.s32 %s1113, %s1111
      %s1115 = smul.addr %s1109, 2
      %s1116 = sadd.s32 %s1114, %s1115
      %s1117 = smul.addr %s1116, 8
      %s1118 = scalar_lea.vmem %s3, %s1117
      // Predicated region
      $region41: #{gqa_forward.4} parent=31 // pred_check
        %p1119 = pneg %p152
      $region42: #{gqa_forward.4} parent=31 // pred_check_branch
        %1121 = sbr.rel (%p1119) target = $region44
      $region43: #{gqa_forward.4} parent=31 // pred_region
        _
      $region44: #{gqa_forward.4} parent=31 // pred_fallthru
        _
    $region32: #{gqa_forward.4} parent=5 // pred_fallthru
      _
    %p1122 = scmp.le.s32.totalorder 2, %s9
    // Predicated region
    $region45: #{gqa_forward.4} parent=5 // pred_check
      %p1123 = pneg %p1122
    $region46: #{gqa_forward.4} parent=5 // pred_check_branch
      %1125 = sbr.rel (%p1123) target = $region48
    $region47: #{gqa_forward.4} parent=5 // pred_region
      %s1126 = ssub.s32 %s9, 2
      // Predicated region
      $region49: #{gqa_forward.4} parent=47 // pred_check
        %p1127 = pneg %p158
      $region50: #{gqa_forward.4} parent=47 // pred_check_branch
        %1129 = sbr.rel (%p1127) target = $region52
      $region51: #{gqa_forward.4} parent=47 // pred_region
        %p1130 = scmp.lt.s32.totalorder %s24, 1
        %s1131 = scalar_select %p1130, %s24, 1
        %p1132 = scmp.lt.s32.totalorder %s25, 1
        %s1133 = scalar_select %p1132, %s25, 1
        %p1134 = scmp.lt.s32.totalorder %s26, 0
        %s1135 = scalar_select %p1134, %s26, 0
        %s1136 = sadd.s32 %s1135, %s1133
        %s1137 = smul.addr %s1131, 2
        %s1138 = sadd.s32 %s1136, %s1137
        %s1139 = smul.addr %s1138, 8
        %s1140 = scalar_lea.vmem %s3, %s1139
      $region52: #{gqa_forward.4} parent=47 // pred_fallthru
        _
    $region48: #{gqa_forward.4} parent=5 // pred_fallthru
      _
  $region6: #{gqa_forward.4} parent=0 // loop_footer
    %s13 = sadd.s32 1, %s9
  $region7: #{gqa_forward.4} parent=0 // loop_footer_branch
    %8 = sbr.rel target = $region3
  $region8: #{gqa_forward.4} parent=0 // loop_exit
    _

</llo_original>
